<compile_context>
chip_gen: v6e
topology: v6e:2x2x1
jax: 0.10.0
libtpu: 0.0.40
codegen_flags: <defaults>
</compile_context>

<pallas_src>
import jax
import jax.numpy as jnp
from jax.experimental import pallas as pl
from jax.experimental.pallas import tpu as pltpu


def _r8(n):
    return (n + 7) // 8 * 8


def _vmem():
    return pl.BlockSpec(memory_space=pltpu.MemorySpace.VMEM)


# ---------------------------------- Wrapper ---------------------------------- #
def critic_lstm_forward(state, time_mark, prev_action, action, params):
    """state: (B, S, Din), time_mark: (B, S, Dt), prev_action/action: (B, A)."""
    B, S, Din = state.shape
    Dt = time_mark.shape[-1]
    H = params["w_hh"].shape[0]
    A = prev_action.shape[-1]
    FC1 = params["w1"].shape[-1]
    FC2 = params["w2"].shape[-1]
    FC3 = params["w3_s"].shape[-1]

    L = 4 * H                 # slab lane width == LSTM gate width (128 for H=32)
    Bp = _r8(B)               # batch padded to full sublane tiles
    Dx = Din + Dt

    # Padded-lane head compute requires every head width to fit in L lanes.
    assert max(H, FC1, FC2, FC3, 2 * A + 1) <= L

    # --- fold the (linear) embedding into the LSTM input weights and fuse the
    #     state/time projections into a single (Dx, 4H) weight:
    #       emb_t @ W_ih == [state_t | time_t] @ [[Wv @ W_ih], [Wt @ W_ih]]
    #                       + (b_emb @ W_ih + b_gate)
    w_x = jnp.concatenate([params["w_val"] @ params["w_ih"],
                           params["w_time"] @ params["w_ih"]], axis=0)   # (Dx,4H)
    b_x = params["b_emb"] @ params["w_ih"] + params["b_gate"]            # (1, 4H)
    w_hh = params["w_hh"]                                                # (H, 4H)

    # --- tanh(z) = 2*sigmoid(2z) - 1: pre-scale the g-gate columns by 2 so the
    #     recurrence needs only ONE sigmoid EUP pass per step (plus tanh(c)).
    gscale = jnp.concatenate([jnp.ones((2 * H,), jnp.float32),
                              jnp.full((H,), 2.0, jnp.float32),
                              jnp.ones((H,), jnp.float32)])
    w_x = w_x * gscale
    b_x = b_x * gscale
    w_hh = w_hh * gscale

    # --- fc4 weights as row vectors for the in-kernel VPU reduction; b4 is
    #     folded into a constant-1 "bias lane" (lane 2A) of the action block.
    w4s_row = jnp.zeros((1, L), jnp.float32).at[0, :FC3].set(params["w4_s"][:, 0])
    w4a_row = (jnp.zeros((1, L), jnp.float32)
               .at[0, A:2 * A].set(params["w4_a"][:, 0])
               .at[0, 2 * A].set(params["b4"][0, 0]))

    # --- pack ALL weights/biases into one zero-padded (R, L) slab -> one DMA.
    #     Every block starts on an 8-row (sublane) boundary; head weights are
    #     zero-padded to L lanes so the head runs in padded lane space with no
    #     in-kernel lane slicing (pad lanes stay exactly zero through relu).
    def _pad_block(a, rows):
        a = a.astype(jnp.float32)
        return jnp.pad(a, ((0, rows - a.shape[0]), (0, L - a.shape[1])))

    blocks, offs = [], {}
    row = 0

    def _add(name, a, rows):
        nonlocal row
        offs[name] = row
        blocks.append(_pad_block(a, rows))
        row += rows

    _add("wx", w_x, _r8(Dx))
    _add("bx", b_x, 8)
    _add("whh", w_hh, _r8(H))
    _add("w1", params["w1"], _r8(H))
    _add("b1", params["b1"], 8)
    _add("w2", params["w2"], L)        # rows padded to L: fc1 output is L lanes
    _add("b2", params["b2"], 8)
    _add("w3s", params["w3_s"], L)
    _add("w3a", params["w3_a"], L)     # rows 0:A hit the prev_action lanes only
    _add("b3", params["b3"], 8)
    _add("w4s", w4s_row, 8)
    _add("w4a", w4a_row, 8)
    slab = jnp.concatenate(blocks, axis=0)                       # (R, L)

    R_WX, R_BX, R_WHH = offs["wx"], offs["bx"], offs["whh"]
    R_W1, R_B1, R_W2, R_B2 = offs["w1"], offs["b1"], offs["w2"], offs["b2"]
    R_W3S, R_W3A, R_B3 = offs["w3s"], offs["w3a"], offs["b3"]
    R_W4S, R_W4A = offs["w4s"], offs["w4a"]

    # --- activations: time-major, batch padded to full sublane tiles; the two
    #     actions plus the fc4 bias lane packed into one (Bp, L) block.
    x = jnp.concatenate([state, time_mark], axis=-1)             # (B, S, Dx)
    x = jnp.transpose(x, (1, 0, 2))                              # (S, B, Dx)
    x = jnp.pad(x, ((0, 0), (0, Bp - B), (0, 0)))                # (S, Bp, Dx)

    act = (jnp.zeros((Bp, L), jnp.float32)
           .at[:B, 0:A].set(prev_action)
           .at[:B, A:2 * A].set(action)
           .at[:, 2 * A].set(1.0))                               # bias lane (b4)

    # -------------------------------- kernel -------------------------------- #
    def kernel(x_ref, act_ref, slab_ref, out_ref, gx_ref):
        # one-time, sublane-aligned views of the packed weight slab
        w_x_v = slab_ref[R_WX:R_WX + Dx, :]
        b_x_v = slab_ref[R_BX:R_BX + 1, :]
        w_hh_v = slab_ref[R_WHH:R_WHH + H, :]

        # hoisted input-side projection: all S*Bp rows in ONE matmul, stored
        # time-major so every recurrence step reads a full aligned tile.
        xs = x_ref[...].reshape(S * Bp, Dx)
        gx_ref[...] = (jnp.dot(xs, w_x_v, preferred_element_type=jnp.float32)
                       + b_x_v)

        h = jnp.zeros((Bp, H), jnp.float32)
        c = jnp.zeros((Bp, H), jnp.float32)

        # serial recurrence, statically unrolled; h/c live in vregs.
        # NOTE: at M=Bp, K=H the h@W_hh matmul cost is weight-push/pop latency;
        # explicit pltpu.matmul_push_rhs staging of W_hh across the S steps is
        # a follow-up if the bundle dump shows the RHS being re-streamed.
        for t in range(S):
            g_in = gx_ref[t * Bp:(t + 1) * Bp, :]                # aligned (Bp,4H)
            gates = g_in + jnp.dot(h, w_hh_v,
                                   preferred_element_type=jnp.float32)
            sg = jax.nn.sigmoid(gates)       # single EUP pass over all 4H lanes
            i = sg[:, 0 * H:1 * H]
            f = sg[:, 1 * H:2 * H]
            g = 2.0 * sg[:, 2 * H:3 * H] - 1.0   # tanh via pre-scaled g columns
            o = sg[:, 3 * H:4 * H]
            c = f * c + i * g
            h = o * jnp.tanh(c)

        # fused FC head in zero-padded L-lane space (pad lanes stay zero):
        # fc1->relu->fc2->relu->cat(prev_action)->fc3->relu->cat(action)->fc4
        a_v = act_ref[...]
        s = jnp.maximum(
            jnp.dot(h, slab_ref[R_W1:R_W1 + H, :],
                    preferred_element_type=jnp.float32)
            + slab_ref[R_B1:R_B1 + 1, :], 0.0)
        s = jnp.maximum(
            jnp.dot(s, slab_ref[R_W2:R_W2 + L, :],
                    preferred_element_type=jnp.float32)
            + slab_ref[R_B2:R_B2 + 1, :], 0.0)
        s = jnp.maximum(
            jnp.dot(s, slab_ref[R_W3S:R_W3S + L, :],
                    preferred_element_type=jnp.float32)
            + jnp.dot(a_v, slab_ref[R_W3A:R_W3A + L, :],
                      preferred_element_type=jnp.float32)
            + slab_ref[R_B3:R_B3 + 1, :], 0.0)
        # fc4 (output width 1): VPU multiply + lane reduction; b4 via bias lane.
        v = (jnp.sum(s * slab_ref[R_W4S:R_W4S + 1, :], axis=-1, keepdims=True)
             + jnp.sum(a_v * slab_ref[R_W4A:R_W4A + 1, :], axis=-1,
                       keepdims=True))
        out_ref[...] = v

    flops = (2 * S * Bp * Dx * L                       # hoisted input projection
             + S * (2 * Bp * H * L + 12 * Bp * H)      # recurrence
             + 2 * Bp * (H * L + 3 * L * L)            # fc1/fc2/fc3 (padded)
             + 4 * Bp * L)                             # fc4 reductions
    transcendentals = S * Bp * (L + H)
    bytes_accessed = 4 * (x.size + act.size + slab.size + Bp)

    out = pl.pallas_call(
        kernel,
        out_shape=jax.ShapeDtypeStruct((Bp, 1), jnp.float32),
        in_specs=[_vmem(), _vmem(), _vmem()],
        out_specs=_vmem(),
        scratch_shapes=[pltpu.VMEM((S * Bp, L), jnp.float32)],
        compiler_params=pltpu.CompilerParams(vmem_limit_bytes=4 * 1024 * 1024),
        cost_estimate=pl.CostEstimate(flops=flops,
                                      transcendentals=transcendentals,
                                      bytes_accessed=bytes_accessed),
    )(x, act, slab)

    return jnp.squeeze(out[:B])        # matches .squeeze() in the torch forward


# --------------------------- Reference (pure JAX) --------------------------- #
def critic_lstm_reference(state, time_mark, prev_action, action, params):
    B, S, _ = state.shape
    H = params["w_hh"].shape[0]
    h = jnp.zeros((B, H), jnp.float32)
    c = jnp.zeros((B, H), jnp.float32)
    for t in range(S):
        x = state[:, t] @ params["w_val"] + time_mark[:, t] @ params["w_time"] \
            + params["b_emb"]
        gates = x @ params["w_ih"] + h @ params["w_hh"] + params["b_gate"]
        i = jax.nn.sigmoid(gates[:, 0 * H:1 * H])
        f = jax.nn.sigmoid(gates[:, 1 * H:2 * H])
        g = jnp.tanh(gates[:, 2 * H:3 * H])
        o = jax.nn.sigmoid(gates[:, 3 * H:4 * H])
        c = f * c + i * g
        h = o * jnp.tanh(c)
    s = jax.nn.relu(h @ params["w1"] + params["b1"])
    s = jax.nn.relu(s @ params["w2"] + params["b2"])
    s = jnp.concatenate([s, prev_action], axis=-1)
    w3 = jnp.concatenate([params["w3_s"], params["w3_a"]], axis=0)
    s = jax.nn.relu(s @ w3 + params["b3"])
    sa = jnp.concatenate([s, action], axis=-1)
    w4 = jnp.concatenate([params["w4_s"], params["w4_a"]], axis=0)
    return jnp.squeeze(sa @ w4 + params["b4"])


# ----------------------------------- Main ------------------------------------ #
if __name__ == "__main__":
    # args
    B, S = 2, 8
    D_IN, D_TIME = 4, 4          # raw state / time-mark feature dims (embedding in)
    D_MODEL = 32                 # args.d_model
    HIDDEN = 32                  # args.hidden_size
    FC1, FC2, FC3 = 32, 16, 16   # args.fc1_out / fc2_out / fc3_out
    NUM_ASSETS = 4
    # num_layers = 1 (required for the torch forward's squeeze/cat to type-check)

    key = jax.random.PRNGKey(0)
    ks = jax.random.split(key, 20)

    def init(k, shape, scale=0.1):
        return (scale * jax.random.normal(k, shape)).astype(jnp.float32)

    params = dict(
        # embedding (value + temporal linear)
        w_val=init(ks[0], (D_IN, D_MODEL)),
        w_time=init(ks[1], (D_TIME, D_MODEL)),
        b_emb=init(ks[2], (1, D_MODEL)),
        # LSTM (W stored as (in, 4H); b_gate = b_ih + b_hh fused, shape (1, 4H))
        w_ih=init(ks[3], (D_MODEL, 4 * HIDDEN)),
        w_hh=init(ks[4], (HIDDEN, 4 * HIDDEN)),
        b_gate=init(ks[5], (1, 4 * HIDDEN)),
        # fc1 / fc2
        w1=init(ks[6], (HIDDEN, FC1)), b1=init(ks[7], (1, FC1)),
        w2=init(ks[8], (FC1, FC2)), b2=init(ks[9], (1, FC2)),
        # fc3 over cat(state, prev_action): split into state / action parts
        w3_s=init(ks[10], (FC2, FC3)),
        w3_a=init(ks[11], (NUM_ASSETS, FC3)),
        b3=init(ks[12], (1, FC3)),
        # fc4 over cat(state, action): split into state / action parts
        w4_s=init(ks[13], (FC3, 1)),
        w4_a=init(ks[14], (NUM_ASSETS, 1)),
        b4=init(ks[15], (1, 1)),
    )

    state = jax.random.normal(ks[16], (B, S, D_IN), dtype=jnp.float32)
    time_mark = jax.random.normal(ks[17], (B, S, D_TIME), dtype=jnp.float32)
    prev_action = jax.nn.softmax(
        jax.random.normal(ks[18], (B, NUM_ASSETS)), axis=-1).astype(jnp.float32)
    action = jax.nn.softmax(
        jax.random.normal(ks[19], (B, NUM_ASSETS)), axis=-1).astype(jnp.float32)

    out = critic_lstm_forward(state, time_mark, prev_action, action, params)
    out = jax.block_until_ready(out)

    ref = critic_lstm_reference(state, time_mark, prev_action, action, params)
    assert out.shape == (B,), out.shape
    assert jnp.allclose(out, ref, atol=2e-5, rtol=2e-5), (out, ref)

    print("KERNEL_OK")
</pallas_src>

<mosaic_0001>
module attributes {stable_mosaic.version = 11 : i64} {
  func.func @kernel(%arg0: memref<8x8x8xf32, #tpu.memory_space<vmem>>, %arg1: memref<8x128xf32, #tpu.memory_space<vmem>>, %arg2: memref<504x128xf32, #tpu.memory_space<vmem>>, %arg3: memref<8x1xf32, #tpu.memory_space<vmem>>, %arg4: memref<64x128xf32, #tpu.memory_space<vmem>>) attributes {dimension_semantics = [], scalar_prefetch = 0 : i64, scratch_operands = 1 : i64, tpu.core_type = #tpu.core_type<tc>} {
    %c0 = arith.constant 0 : index
    %c0_0 = arith.constant 0 : index
    %0 = vector.load %arg2[%c0, %c0_0] : memref<504x128xf32, #tpu.memory_space<vmem>>, vector<8x128xf32>
    %c8 = arith.constant 8 : index
    %c0_1 = arith.constant 0 : index
    %1 = vector.load %arg2[%c8, %c0_1] : memref<504x128xf32, #tpu.memory_space<vmem>>, vector<1x128xf32>
    %c16 = arith.constant 16 : index
    %c0_2 = arith.constant 0 : index
    %2 = vector.load %arg2[%c16, %c0_2] : memref<504x128xf32, #tpu.memory_space<vmem>>, vector<32x128xf32>
    %c0_3 = arith.constant 0 : index
    %c0_4 = arith.constant 0 : index
    %c0_5 = arith.constant 0 : index
    %3 = vector.load %arg0[%c0_3, %c0_4, %c0_5] : memref<8x8x8xf32, #tpu.memory_space<vmem>>, vector<8x8x8xf32>
    %4 = vector.shape_cast %3 : vector<8x8x8xf32> to vector<64x8xf32>
    %cst = arith.constant dense<0.000000e+00> : vector<64x128xf32>
    %5 = tpu.matmul %4, %0, %cst {dimension_numbers = #tpu.dot_dimension_numbers<[1], [0], [0], [1], [0, 0, 1, 1], [], []>} : vector<64x8xf32>, vector<8x128xf32>, vector<64x128xf32> -> vector<64x128xf32>
    %6 = vector.broadcast %1 : vector<1x128xf32> to vector<64x128xf32>
    %7 = arith.addf %5, %6 : vector<64x128xf32>
    %c0_6 = arith.constant 0 : index
    %c0_7 = arith.constant 0 : index
    %8 = vector.load %arg4[%c0_6, %c0_7] : memref<64x128xf32, #tpu.memory_space<vmem>>, vector<64x128xf32>
    tpu.vector_store %arg4[%c0_6, %c0_7], %7 {strides = array<i32>} : memref<64x128xf32, #tpu.memory_space<vmem>>, vector<64x128xf32>,
    %cst_8 = arith.constant 0.000000e+00 : f32
    %9 = vector.broadcast %cst_8 : f32 to vector<8x32xf32>
    %cst_9 = arith.constant 0.000000e+00 : f32
    %10 = vector.broadcast %cst_9 : f32 to vector<8x32xf32>
    %c0_10 = arith.constant 0 : index
    %c0_11 = arith.constant 0 : index
    %11 = vector.load %arg4[%c0_10, %c0_11] : memref<64x128xf32, #tpu.memory_space<vmem>>, vector<8x128xf32>
    %cst_12 = arith.constant dense<0.000000e+00> : vector<8x128xf32>
    %12 = tpu.matmul %9, %2, %cst_12 {dimension_numbers = #tpu.dot_dimension_numbers<[1], [0], [0], [1], [0, 0, 1, 1], [], []>} : vector<8x32xf32>, vector<32x128xf32>, vector<8x128xf32> -> vector<8x128xf32>
    %13 = arith.addf %11, %12 : vector<8x128xf32>
    %14 = arith.negf %13 : vector<8x128xf32>
    %15 = math.exp %14 : vector<8x128xf32>
    %cst_13 = arith.constant 1.000000e+00 : f32
    %16 = vector.broadcast %cst_13 : f32 to vector<8x128xf32>
    %17 = arith.addf %16, %15 : vector<8x128xf32>
    %18 = arith.divf %16, %17 : vector<8x128xf32>
    %19 = vector.extract_strided_slice %18 {offsets = [0, 0], sizes = [8, 32], strides = [1, 1]} : vector<8x128xf32> to vector<8x32xf32>
    %20 = vector.extract_strided_slice %18 {offsets = [0, 32], sizes = [8, 32], strides = [1, 1]} : vector<8x128xf32> to vector<8x32xf32>
    %21 = vector.extract_strided_slice %18 {offsets = [0, 64], sizes = [8, 32], strides = [1, 1]} : vector<8x128xf32> to vector<8x32xf32>
    %cst_14 = arith.constant 2.000000e+00 : f32
    %22 = vector.broadcast %cst_14 : f32 to vector<8x32xf32>
    %23 = arith.mulf %22, %21 : vector<8x32xf32>
    %cst_15 = arith.constant 1.000000e+00 : f32
    %24 = vector.broadcast %cst_15 : f32 to vector<8x32xf32>
    %25 = arith.subf %23, %24 : vector<8x32xf32>
    %26 = vector.extract_strided_slice %18 {offsets = [0, 96], sizes = [8, 32], strides = [1, 1]} : vector<8x128xf32> to vector<8x32xf32>
    %27 = arith.mulf %20, %10 : vector<8x32xf32>
    %28 = arith.mulf %19, %25 : vector<8x32xf32>
    %29 = arith.addf %27, %28 : vector<8x32xf32>
    %30 = math.tanh %29 : vector<8x32xf32>
    %31 = arith.mulf %26, %30 : vector<8x32xf32>
    %c8_16 = arith.constant 8 : index
    %c0_17 = arith.constant 0 : index
    %32 = vector.load %arg4[%c8_16, %c0_17] : memref<64x128xf32, #tpu.memory_space<vmem>>, vector<8x128xf32>
    %cst_18 = arith.constant dense<0.000000e+00> : vector<8x128xf32>
    %33 = tpu.matmul %31, %2, %cst_18 {dimension_numbers = #tpu.dot_dimension_numbers<[1], [0], [0], [1], [0, 0, 1, 1], [], []>} : vector<8x32xf32>, vector<32x128xf32>, vector<8x128xf32> -> vector<8x128xf32>
    %34 = arith.addf %32, %33 : vector<8x128xf32>
    %35 = arith.negf %34 : vector<8x128xf32>
    %36 = math.exp %35 : vector<8x128xf32>
    %cst_19 = arith.constant 1.000000e+00 : f32
    %37 = vector.broadcast %cst_19 : f32 to vector<8x128xf32>
    %38 = arith.addf %37, %36 : vector<8x128xf32>
    %39 = arith.divf %37, %38 : vector<8x128xf32>
    %40 = vector.extract_strided_slice %39 {offsets = [0, 0], sizes = [8, 32], strides = [1, 1]} : vector<8x128xf32> to vector<8x32xf32>
    %41 = vector.extract_strided_slice %39 {offsets = [0, 32], sizes = [8, 32], strides = [1, 1]} : vector<8x128xf32> to vector<8x32xf32>
    %42 = vector.extract_strided_slice %39 {offsets = [0, 64], sizes = [8, 32], strides = [1, 1]} : vector<8x128xf32> to vector<8x32xf32>
    %cst_20 = arith.constant 2.000000e+00 : f32
    %43 = vector.broadcast %cst_20 : f32 to vector<8x32xf32>
    %44 = arith.mulf %43, %42 : vector<8x32xf32>
    %cst_21 = arith.constant 1.000000e+00 : f32
    %45 = vector.broadcast %cst_21 : f32 to vector<8x32xf32>
    %46 = arith.subf %44, %45 : vector<8x32xf32>
    %47 = vector.extract_strided_slice %39 {offsets = [0, 96], sizes = [8, 32], strides = [1, 1]} : vector<8x128xf32> to vector<8x32xf32>
    %48 = arith.mulf %41, %29 : vector<8x32xf32>
    %49 = arith.mulf %40, %46 : vector<8x32xf32>
    %50 = arith.addf %48, %49 : vector<8x32xf32>
    %51 = math.tanh %50 : vector<8x32xf32>
    %52 = arith.mulf %47, %51 : vector<8x32xf32>
    %c16_22 = arith.constant 16 : index
    %c0_23 = arith.constant 0 : index
    %53 = vector.load %arg4[%c16_22, %c0_23] : memref<64x128xf32, #tpu.memory_space<vmem>>, vector<8x128xf32>
    %cst_24 = arith.constant dense<0.000000e+00> : vector<8x128xf32>
    %54 = tpu.matmul %52, %2, %cst_24 {dimension_numbers = #tpu.dot_dimension_numbers<[1], [0], [0], [1], [0, 0, 1, 1], [], []>} : vector<8x32xf32>, vector<32x128xf32>, vector<8x128xf32> -> vector<8x128xf32>
    %55 = arith.addf %53, %54 : vector<8x128xf32>
    %56 = arith.negf %55 : vector<8x128xf32>
    %57 = math.exp %56 : vector<8x128xf32>
    %cst_25 = arith.constant 1.000000e+00 : f32
    %58 = vector.broadcast %cst_25 : f32 to vector<8x128xf32>
    %59 = arith.addf %58, %57 : vector<8x128xf32>
    %60 = arith.divf %58, %59 : vector<8x128xf32>
    %61 = vector.extract_strided_slice %60 {offsets = [0, 0], sizes = [8, 32], strides = [1, 1]} : vector<8x128xf32> to vector<8x32xf32>
    %62 = vector.extract_strided_slice %60 {offsets = [0, 32], sizes = [8, 32], strides = [1, 1]} : vector<8x128xf32> to vector<8x32xf32>
    %63 = vector.extract_strided_slice %60 {offsets = [0, 64], sizes = [8, 32], strides = [1, 1]} : vector<8x128xf32> to vector<8x32xf32>
    %cst_26 = arith.constant 2.000000e+00 : f32
    %64 = vector.broadcast %cst_26 : f32 to vector<8x32xf32>
    %65 = arith.mulf %64, %63 : vector<8x32xf32>
    %cst_27 = arith.constant 1.000000e+00 : f32
    %66 = vector.broadcast %cst_27 : f32 to vector<8x32xf32>
    %67 = arith.subf %65, %66 : vector<8x32xf32>
    %68 = vector.extract_strided_slice %60 {offsets = [0, 96], sizes = [8, 32], strides = [1, 1]} : vector<8x128xf32> to vector<8x32xf32>
    %69 = arith.mulf %62, %50 : vector<8x32xf32>
    %70 = arith.mulf %61, %67 : vector<8x32xf32>
    %71 = arith.addf %69, %70 : vector<8x32xf32>
    %72 = math.tanh %71 : vector<8x32xf32>
    %73 = arith.mulf %68, %72 : vector<8x32xf32>
    %c24 = arith.constant 24 : index
    %c0_28 = arith.constant 0 : index
    %74 = vector.load %arg4[%c24, %c0_28] : memref<64x128xf32, #tpu.memory_space<vmem>>, vector<8x128xf32>
    %cst_29 = arith.constant dense<0.000000e+00> : vector<8x128xf32>
    %75 = tpu.matmul %73, %2, %cst_29 {dimension_numbers = #tpu.dot_dimension_numbers<[1], [0], [0], [1], [0, 0, 1, 1], [], []>} : vector<8x32xf32>, vector<32x128xf32>, vector<8x128xf32> -> vector<8x128xf32>
    %76 = arith.addf %74, %75 : vector<8x128xf32>
    %77 = arith.negf %76 : vector<8x128xf32>
    %78 = math.exp %77 : vector<8x128xf32>
    %cst_30 = arith.constant 1.000000e+00 : f32
    %79 = vector.broadcast %cst_30 : f32 to vector<8x128xf32>
    %80 = arith.addf %79, %78 : vector<8x128xf32>
    %81 = arith.divf %79, %80 : vector<8x128xf32>
    %82 = vector.extract_strided_slice %81 {offsets = [0, 0], sizes = [8, 32], strides = [1, 1]} : vector<8x128xf32> to vector<8x32xf32>
    %83 = vector.extract_strided_slice %81 {offsets = [0, 32], sizes = [8, 32], strides = [1, 1]} : vector<8x128xf32> to vector<8x32xf32>
    %84 = vector.extract_strided_slice %81 {offsets = [0, 64], sizes = [8, 32], strides = [1, 1]} : vector<8x128xf32> to vector<8x32xf32>
    %cst_31 = arith.constant 2.000000e+00 : f32
    %85 = vector.broadcast %cst_31 : f32 to vector<8x32xf32>
    %86 = arith.mulf %85, %84 : vector<8x32xf32>
    %cst_32 = arith.constant 1.000000e+00 : f32
    %87 = vector.broadcast %cst_32 : f32 to vector<8x32xf32>
    %88 = arith.subf %86, %87 : vector<8x32xf32>
    %89 = vector.extract_strided_slice %81 {offsets = [0, 96], sizes = [8, 32], strides = [1, 1]} : vector<8x128xf32> to vector<8x32xf32>
    %90 = arith.mulf %83, %71 : vector<8x32xf32>
    %91 = arith.mulf %82, %88 : vector<8x32xf32>
    %92 = arith.addf %90, %91 : vector<8x32xf32>
    %93 = math.tanh %92 : vector<8x32xf32>
    %94 = arith.mulf %89, %93 : vector<8x32xf32>
    %c32 = arith.constant 32 : index
    %c0_33 = arith.constant 0 : index
    %95 = vector.load %arg4[%c32, %c0_33] : memref<64x128xf32, #tpu.memory_space<vmem>>, vector<8x128xf32>
    %cst_34 = arith.constant dense<0.000000e+00> : vector<8x128xf32>
    %96 = tpu.matmul %94, %2, %cst_34 {dimension_numbers = #tpu.dot_dimension_numbers<[1], [0], [0], [1], [0, 0, 1, 1], [], []>} : vector<8x32xf32>, vector<32x128xf32>, vector<8x128xf32> -> vector<8x128xf32>
    %97 = arith.addf %95, %96 : vector<8x128xf32>
    %98 = arith.negf %97 : vector<8x128xf32>
    %99 = math.exp %98 : vector<8x128xf32>
    %cst_35 = arith.constant 1.000000e+00 : f32
    %100 = vector.broadcast %cst_35 : f32 to vector<8x128xf32>
    %101 = arith.addf %100, %99 : vector<8x128xf32>
    %102 = arith.divf %100, %101 : vector<8x128xf32>
    %103 = vector.extract_strided_slice %102 {offsets = [0, 0], sizes = [8, 32], strides = [1, 1]} : vector<8x128xf32> to vector<8x32xf32>
    %104 = vector.extract_strided_slice %102 {offsets = [0, 32], sizes = [8, 32], strides = [1, 1]} : vector<8x128xf32> to vector<8x32xf32>
    %105 = vector.extract_strided_slice %102 {offsets = [0, 64], sizes = [8, 32], strides = [1, 1]} : vector<8x128xf32> to vector<8x32xf32>
    %cst_36 = arith.constant 2.000000e+00 : f32
    %106 = vector.broadcast %cst_36 : f32 to vector<8x32xf32>
    %107 = arith.mulf %106, %105 : vector<8x32xf32>
    %cst_37 = arith.constant 1.000000e+00 : f32
    %108 = vector.broadcast %cst_37 : f32 to vector<8x32xf32>
    %109 = arith.subf %107, %108 : vector<8x32xf32>
    %110 = vector.extract_strided_slice %102 {offsets = [0, 96], sizes = [8, 32], strides = [1, 1]} : vector<8x128xf32> to vector<8x32xf32>
    %111 = arith.mulf %104, %92 : vector<8x32xf32>
    %112 = arith.mulf %103, %109 : vector<8x32xf32>
    %113 = arith.addf %111, %112 : vector<8x32xf32>
    %114 = math.tanh %113 : vector<8x32xf32>
    %115 = arith.mulf %110, %114 : vector<8x32xf32>
    %c40 = arith.constant 40 : index
    %c0_38 = arith.constant 0 : index
    %116 = vector.load %arg4[%c40, %c0_38] : memref<64x128xf32, #tpu.memory_space<vmem>>, vector<8x128xf32>
    %cst_39 = arith.constant dense<0.000000e+00> : vector<8x128xf32>
    %117 = tpu.matmul %115, %2, %cst_39 {dimension_numbers = #tpu.dot_dimension_numbers<[1], [0], [0], [1], [0, 0, 1, 1], [], []>} : vector<8x32xf32>, vector<32x128xf32>, vector<8x128xf32> -> vector<8x128xf32>
    %118 = arith.addf %116, %117 : vector<8x128xf32>
    %119 = arith.negf %118 : vector<8x128xf32>
    %120 = math.exp %119 : vector<8x128xf32>
    %cst_40 = arith.constant 1.000000e+00 : f32
    %121 = vector.broadcast %cst_40 : f32 to vector<8x128xf32>
    %122 = arith.addf %121, %120 : vector<8x128xf32>
    %123 = arith.divf %121, %122 : vector<8x128xf32>
    %124 = vector.extract_strided_slice %123 {offsets = [0, 0], sizes = [8, 32], strides = [1, 1]} : vector<8x128xf32> to vector<8x32xf32>
    %125 = vector.extract_strided_slice %123 {offsets = [0, 32], sizes = [8, 32], strides = [1, 1]} : vector<8x128xf32> to vector<8x32xf32>
    %126 = vector.extract_strided_slice %123 {offsets = [0, 64], sizes = [8, 32], strides = [1, 1]} : vector<8x128xf32> to vector<8x32xf32>
    %cst_41 = arith.constant 2.000000e+00 : f32
    %127 = vector.broadcast %cst_41 : f32 to vector<8x32xf32>
    %128 = arith.mulf %127, %126 : vector<8x32xf32>
    %cst_42 = arith.constant 1.000000e+00 : f32
    %129 = vector.broadcast %cst_42 : f32 to vector<8x32xf32>
    %130 = arith.subf %128, %129 : vector<8x32xf32>
    %131 = vector.extract_strided_slice %123 {offsets = [0, 96], sizes = [8, 32], strides = [1, 1]} : vector<8x128xf32> to vector<8x32xf32>
    %132 = arith.mulf %125, %113 : vector<8x32xf32>
    %133 = arith.mulf %124, %130 : vector<8x32xf32>
    %134 = arith.addf %132, %133 : vector<8x32xf32>
    %135 = math.tanh %134 : vector<8x32xf32>
    %136 = arith.mulf %131, %135 : vector<8x32xf32>
    %c48 = arith.constant 48 : index
    %c0_43 = arith.constant 0 : index
    %137 = vector.load %arg4[%c48, %c0_43] : memref<64x128xf32, #tpu.memory_space<vmem>>, vector<8x128xf32>
    %cst_44 = arith.constant dense<0.000000e+00> : vector<8x128xf32>
    %138 = tpu.matmul %136, %2, %cst_44 {dimension_numbers = #tpu.dot_dimension_numbers<[1], [0], [0], [1], [0, 0, 1, 1], [], []>} : vector<8x32xf32>, vector<32x128xf32>, vector<8x128xf32> -> vector<8x128xf32>
    %139 = arith.addf %137, %138 : vector<8x128xf32>
    %140 = arith.negf %139 : vector<8x128xf32>
    %141 = math.exp %140 : vector<8x128xf32>
    %cst_45 = arith.constant 1.000000e+00 : f32
    %142 = vector.broadcast %cst_45 : f32 to vector<8x128xf32>
    %143 = arith.addf %142, %141 : vector<8x128xf32>
    %144 = arith.divf %142, %143 : vector<8x128xf32>
    %145 = vector.extract_strided_slice %144 {offsets = [0, 0], sizes = [8, 32], strides = [1, 1]} : vector<8x128xf32> to vector<8x32xf32>
    %146 = vector.extract_strided_slice %144 {offsets = [0, 32], sizes = [8, 32], strides = [1, 1]} : vector<8x128xf32> to vector<8x32xf32>
    %147 = vector.extract_strided_slice %144 {offsets = [0, 64], sizes = [8, 32], strides = [1, 1]} : vector<8x128xf32> to vector<8x32xf32>
    %cst_46 = arith.constant 2.000000e+00 : f32
    %148 = vector.broadcast %cst_46 : f32 to vector<8x32xf32>
    %149 = arith.mulf %148, %147 : vector<8x32xf32>
    %cst_47 = arith.constant 1.000000e+00 : f32
    %150 = vector.broadcast %cst_47 : f32 to vector<8x32xf32>
    %151 = arith.subf %149, %150 : vector<8x32xf32>
    %152 = vector.extract_strided_slice %144 {offsets = [0, 96], sizes = [8, 32], strides = [1, 1]} : vector<8x128xf32> to vector<8x32xf32>
    %153 = arith.mulf %146, %134 : vector<8x32xf32>
    %154 = arith.mulf %145, %151 : vector<8x32xf32>
    %155 = arith.addf %153, %154 : vector<8x32xf32>
    %156 = math.tanh %155 : vector<8x32xf32>
    %157 = arith.mulf %152, %156 : vector<8x32xf32>
    %c56 = arith.constant 56 : index
    %c0_48 = arith.constant 0 : index
    %158 = vector.load %arg4[%c56, %c0_48] : memref<64x128xf32, #tpu.memory_space<vmem>>, vector<8x128xf32>
    %cst_49 = arith.constant dense<0.000000e+00> : vector<8x128xf32>
    %159 = tpu.matmul %157, %2, %cst_49 {dimension_numbers = #tpu.dot_dimension_numbers<[1], [0], [0], [1], [0, 0, 1, 1], [], []>} : vector<8x32xf32>, vector<32x128xf32>, vector<8x128xf32> -> vector<8x128xf32>
    %160 = arith.addf %158, %159 : vector<8x128xf32>
    %161 = arith.negf %160 : vector<8x128xf32>
    %162 = math.exp %161 : vector<8x128xf32>
    %cst_50 = arith.constant 1.000000e+00 : f32
    %163 = vector.broadcast %cst_50 : f32 to vector<8x128xf32>
    %164 = arith.addf %163, %162 : vector<8x128xf32>
    %165 = arith.divf %163, %164 : vector<8x128xf32>
    %166 = vector.extract_strided_slice %165 {offsets = [0, 0], sizes = [8, 32], strides = [1, 1]} : vector<8x128xf32> to vector<8x32xf32>
    %167 = vector.extract_strided_slice %165 {offsets = [0, 32], sizes = [8, 32], strides = [1, 1]} : vector<8x128xf32> to vector<8x32xf32>
    %168 = vector.extract_strided_slice %165 {offsets = [0, 64], sizes = [8, 32], strides = [1, 1]} : vector<8x128xf32> to vector<8x32xf32>
    %cst_51 = arith.constant 2.000000e+00 : f32
    %169 = vector.broadcast %cst_51 : f32 to vector<8x32xf32>
    %170 = arith.mulf %169, %168 : vector<8x32xf32>
    %cst_52 = arith.constant 1.000000e+00 : f32
    %171 = vector.broadcast %cst_52 : f32 to vector<8x32xf32>
    %172 = arith.subf %170, %171 : vector<8x32xf32>
    %173 = vector.extract_strided_slice %165 {offsets = [0, 96], sizes = [8, 32], strides = [1, 1]} : vector<8x128xf32> to vector<8x32xf32>
    %174 = arith.mulf %167, %155 : vector<8x32xf32>
    %175 = arith.mulf %166, %172 : vector<8x32xf32>
    %176 = arith.addf %174, %175 : vector<8x32xf32>
    %177 = math.tanh %176 : vector<8x32xf32>
    %178 = arith.mulf %173, %177 : vector<8x32xf32>
    %c0_53 = arith.constant 0 : index
    %c0_54 = arith.constant 0 : index
    %179 = vector.load %arg1[%c0_53, %c0_54] : memref<8x128xf32, #tpu.memory_space<vmem>>, vector<8x128xf32>
    %c48_55 = arith.constant 48 : index
    %c0_56 = arith.constant 0 : index
    %180 = vector.load %arg2[%c48_55, %c0_56] : memref<504x128xf32, #tpu.memory_space<vmem>>, vector<32x128xf32>
    %cst_57 = arith.constant dense<0.000000e+00> : vector<8x128xf32>
    %181 = tpu.matmul %178, %180, %cst_57 {dimension_numbers = #tpu.dot_dimension_numbers<[1], [0], [0], [1], [0, 0, 1, 1], [], []>} : vector<8x32xf32>, vector<32x128xf32>, vector<8x128xf32> -> vector<8x128xf32>
    %c80 = arith.constant 80 : index
    %c0_58 = arith.constant 0 : index
    %182 = vector.load %arg2[%c80, %c0_58] : memref<504x128xf32, #tpu.memory_space<vmem>>, vector<1x128xf32>
    %183 = vector.broadcast %182 : vector<1x128xf32> to vector<8x128xf32>
    %184 = arith.addf %181, %183 : vector<8x128xf32>
    %cst_59 = arith.constant 0.000000e+00 : f32
    %185 = vector.broadcast %cst_59 : f32 to vector<8x128xf32>
    %186 = arith.maximumf %184, %185 : vector<8x128xf32>
    %c88 = arith.constant 88 : index
    %c0_60 = arith.constant 0 : index
    %187 = vector.load %arg2[%c88, %c0_60] : memref<504x128xf32, #tpu.memory_space<vmem>>, vector<128x128xf32>
    %cst_61 = arith.constant dense<0.000000e+00> : vector<8x128xf32>
    %188 = tpu.matmul %186, %187, %cst_61 {dimension_numbers = #tpu.dot_dimension_numbers<[1], [0], [0], [1], [0, 0, 1, 1], [], []>} : vector<8x128xf32>, vector<128x128xf32>, vector<8x128xf32> -> vector<8x128xf32>
    %c216 = arith.constant 216 : index
    %c0_62 = arith.constant 0 : index
    %189 = vector.load %arg2[%c216, %c0_62] : memref<504x128xf32, #tpu.memory_space<vmem>>, vector<1x128xf32>
    %190 = vector.broadcast %189 : vector<1x128xf32> to vector<8x128xf32>
    %191 = arith.addf %188, %190 : vector<8x128xf32>
    %cst_63 = arith.constant 0.000000e+00 : f32
    %192 = vector.broadcast %cst_63 : f32 to vector<8x128xf32>
    %193 = arith.maximumf %191, %192 : vector<8x128xf32>
    %c224 = arith.constant 224 : index
    %c0_64 = arith.constant 0 : index
    %194 = vector.load %arg2[%c224, %c0_64] : memref<504x128xf32, #tpu.memory_space<vmem>>, vector<128x128xf32>
    %cst_65 = arith.constant dense<0.000000e+00> : vector<8x128xf32>
    %195 = tpu.matmul %193, %194, %cst_65 {dimension_numbers = #tpu.dot_dimension_numbers<[1], [0], [0], [1], [0, 0, 1, 1], [], []>} : vector<8x128xf32>, vector<128x128xf32>, vector<8x128xf32> -> vector<8x128xf32>
    %c352 = arith.constant 352 : index
    %c0_66 = arith.constant 0 : index
    %196 = vector.load %arg2[%c352, %c0_66] : memref<504x128xf32, #tpu.memory_space<vmem>>, vector<128x128xf32>
    %cst_67 = arith.constant dense<0.000000e+00> : vector<8x128xf32>
    %197 = tpu.matmul %179, %196, %cst_67 {dimension_numbers = #tpu.dot_dimension_numbers<[1], [0], [0], [1], [0, 0, 1, 1], [], []>} : vector<8x128xf32>, vector<128x128xf32>, vector<8x128xf32> -> vector<8x128xf32>
    %198 = arith.addf %195, %197 : vector<8x128xf32>
    %c480 = arith.constant 480 : index
    %c0_68 = arith.constant 0 : index
    %199 = vector.load %arg2[%c480, %c0_68] : memref<504x128xf32, #tpu.memory_space<vmem>>, vector<1x128xf32>
    %200 = vector.broadcast %199 : vector<1x128xf32> to vector<8x128xf32>
    %201 = arith.addf %198, %200 : vector<8x128xf32>
    %cst_69 = arith.constant 0.000000e+00 : f32
    %202 = vector.broadcast %cst_69 : f32 to vector<8x128xf32>
    %203 = arith.maximumf %201, %202 : vector<8x128xf32>
    %c488 = arith.constant 488 : index
    %c0_70 = arith.constant 0 : index
    %204 = vector.load %arg2[%c488, %c0_70] : memref<504x128xf32, #tpu.memory_space<vmem>>, vector<1x128xf32>
    %205 = vector.broadcast %204 : vector<1x128xf32> to vector<8x128xf32>
    %206 = arith.mulf %203, %205 : vector<8x128xf32>
    %cst_71 = arith.constant dense<0.000000e+00> : vector<8xf32>
    %207 = vector.multi_reduction <add>, %206, %cst_71 [1] : vector<8x128xf32> to vector<8xf32>
    %208 = vector.shape_cast %207 : vector<8xf32> to vector<8x1xf32>
    %c496 = arith.constant 496 : index
    %c0_72 = arith.constant 0 : index
    %209 = vector.load %arg2[%c496, %c0_72] : memref<504x128xf32, #tpu.memory_space<vmem>>, vector<1x128xf32>
    %210 = vector.broadcast %209 : vector<1x128xf32> to vector<8x128xf32>
    %211 = arith.mulf %179, %210 : vector<8x128xf32>
    %cst_73 = arith.constant dense<0.000000e+00> : vector<8xf32>
    %212 = vector.multi_reduction <add>, %211, %cst_73 [1] : vector<8x128xf32> to vector<8xf32>
    %213 = vector.shape_cast %212 : vector<8xf32> to vector<8x1xf32>
    %214 = arith.addf %208, %213 : vector<8x1xf32>
    %c0_74 = arith.constant 0 : index
    %c0_75 = arith.constant 0 : index
    %215 = vector.load %arg3[%c0_74, %c0_75] : memref<8x1xf32, #tpu.memory_space<vmem>>, vector<8x1xf32>
    tpu.vector_store %arg3[%c0_74, %c0_75], %214 {strides = array<i32>} : memref<8x1xf32, #tpu.memory_space<vmem>>, vector<8x1xf32>,
    return
  }
}

</mosaic_0001>

<llo_original>
// kernel: tpu_custom_call.1
$region0: #{tpu_custom_call.1}
  #allocation0 [shape = 'u32[]', space=smem, size = 0x4, offset = 0x4, fixed_abs, tag = 'smem constant byte address 0x4 - core index']
  #allocation1 [shape = 'u32[144,128]{1,0:T(1,128)}', space=vmem, size = 0x12000, scoped, tag = 'internal scratch']
  #allocation2 [shape = 'f32[64,128]{1,0:T(8,128)}', space=vmem, size = 0x8000, scoped, tag = 'scratch operand']
  %s0 = inlined_call_operand.hbm [shape: f32[8,8,8], index: 0, kind: input, shape index: {}]
  %s1 = inlined_call_operand.hbm [shape: f32[8,128], index: 1, kind: input, shape index: {}]
  %s2 = inlined_call_operand.hbm [shape: f32[504,128], index: 2, kind: input, shape index: {}]
  %s3 = inlined_call_operand.vmem [shape: f32[8,1], index: 3, kind: output, shape index: {}]
  %s4 = sld [smem:[#allocation0]]
  $region34: #{tpu_custom_call.1} parent=0
    _
  %s6 = ssub.s32 1, %s4
  %s7 = scalar_select 0, %s6, %s4
  $region1: #{tpu_custom_call.1} parent=0
    #allocation3 [shape = 'u8[32768]{0}', space=vmem, size = 0x8000, scoped, tag = 'input window, operand 0, single buffered']
    #allocation4 [shape = 's32[1]{0}', space=sflag, size = 0x4, scoped, tag = 'scoped memory for tpu_custom_call.1']
    #allocation5 [shape = 'u8[4096]{0}', space=vmem, size = 0x1000, scoped, tag = 'input window, operand 1, single buffered']
    #allocation6 [shape = 's32[1]{0}', space=sflag, size = 0x4, scoped, tag = 'scoped memory for tpu_custom_call.1']
    #allocation7 [shape = 'u8[258048]{0}', space=vmem, size = 0x3f000, scoped, tag = 'input window, operand 2, single buffered']
    %8 = vsyncpa [#allocation4], 0
    %9 = vsyncpa [#allocation6], 0
    // Predicated region
    $region2: #{tpu_custom_call.1} parent=1 // pred_check
      _
    $region3: #{tpu_custom_call.1} parent=1 // pred_check_branch
      %11 = sbr.rel (0) target = $region5
    $region4: #{tpu_custom_call.1} parent=1 // pred_region
      %s13 = ssub.s32 1024, 1024
      %14 = vsyncadd [#allocation4], %s13
      %s15 = sshll.u32 [#allocation3], 4
      %s16 = int_to_ptr.vmem [resolvable:$true] %s15
      %21 = dma.hbm_to_vmem [thread:$0]  %s0, 1024, %s16, [#allocation4], 128, 128, 8
    $region5: #{tpu_custom_call.1} parent=1 // pred_fallthru
      _
    // Predicated region
    $region6: #{tpu_custom_call.1} parent=1 // pred_check
      _
    $region7: #{tpu_custom_call.1} parent=1 // pred_check_branch
      %23 = sbr.rel (0) target = $region9
    $region8: #{tpu_custom_call.1} parent=1 // pred_region
      %s25 = ssub.s32 128, 128
      %26 = vsyncadd [#allocation6], %s25
      %s28 = sshll.u32 [#allocation5], 4
      %s29 = int_to_ptr.vmem [resolvable:$true] %s28
      %31 = dma.hbm_to_vmem [thread:$0]  %s1, 128, %s29, [#allocation6]
    $region9: #{tpu_custom_call.1} parent=1 // pred_fallthru
      _
    // Predicated region
    $region10: #{tpu_custom_call.1} parent=1 // pred_check
      _
    $region11: #{tpu_custom_call.1} parent=1 // pred_check_branch
      %33 = sbr.rel (0) target = $region13
    $region12: #{tpu_custom_call.1} parent=1 // pred_region
      %s35 = ssub.s32 8064, 8064
      %36 = vsyncadd [#allocation6], %s35
      %s37 = sshll.u32 [#allocation7], 4
      %s38 = int_to_ptr.vmem [resolvable:$true] %s37
      %43 = dma.hbm_to_vmem [thread:$0]  %s2, 8064, %s38, [#allocation6], 128, 128, 8
    $region13: #{tpu_custom_call.1} parent=1 // pred_fallthru
      _
    // Predicated region
    $region14: #{tpu_custom_call.1} parent=1 // pred_check
      _
    $region15: #{tpu_custom_call.1} parent=1 // pred_check_branch
      %45 = sbr.rel (0) target = $region17
    $region16: #{tpu_custom_call.1} parent=1 // pred_region
      %46 = dma.done [#allocation4], 1024
    $region17: #{tpu_custom_call.1} parent=1 // pred_fallthru
      _
    // Predicated region
    $region18: #{tpu_custom_call.1} parent=1 // pred_check
      _
    $region19: #{tpu_custom_call.1} parent=1 // pred_check_branch
      %48 = sbr.rel (0) target = $region21
    $region20: #{tpu_custom_call.1} parent=1 // pred_region
      %49 = dma.done [#allocation6], 128
    $region21: #{tpu_custom_call.1} parent=1 // pred_fallthru
      _
    // Predicated region
    $region22: #{tpu_custom_call.1} parent=1 // pred_check
      _
    $region23: #{tpu_custom_call.1} parent=1 // pred_check_branch
      %51 = sbr.rel (0) target = $region25
    $region24: #{tpu_custom_call.1} parent=1 // pred_region
      %52 = dma.done [#allocation6], 8064
    $region25: #{tpu_custom_call.1} parent=1 // pred_fallthru
      _
    %v53 = vld [vmem:[#allocation7] sm:$0xff]
    %v54 = vld [vmem:[#allocation7 + $0x8] sm:$0x1]
    %v55 = vld [vmem:[#allocation7 + $0x10] sm:$0xff]
    %v56 = vld [vmem:[#allocation7 + $0x18] sm:$0xff]
    %v57 = vld [vmem:[#allocation7 + $0x20] sm:$0xff]
    %v58 = vld [vmem:[#allocation7 + $0x28] sm:$0xff]
    %v59 = vld [vmem:[#allocation3] sm:$0xff]
    %v60 = vld [vmem:[#allocation3 + $0x8] sm:$0xff]
    %v61 = vld [vmem:[#allocation3 + $0x10] sm:$0xff]
    %v62 = vld [vmem:[#allocation3 + $0x18] sm:$0xff]
    %v63 = vld [vmem:[#allocation3 + $0x20] sm:$0xff]
    %v64 = vld [vmem:[#allocation3 + $0x28] sm:$0xff]
    %v65 = vld [vmem:[#allocation3 + $0x30] sm:$0xff]
    %v66 = vld [vmem:[#allocation3 + $0x38] sm:$0xff]
    %v67 = vlaneseq
    %v68 = vshrl.u32 %v67, 7
    %v69 = vsub.s32 0, %v68
    %v70 = vrot.slane %v54, %v69
    %vm71 = vcmask 64512
    %v73 = vsel %vm71, %v59, 0
    %v76 = vsel %vm71, %v60, 0
    %v79 = vsel %vm71, %v61, 0
    %v82 = vsel %vm71, %v62, 0
    %v85 = vsel %vm71, %v63, 0
    %v88 = vsel %vm71, %v64, 0
    %v91 = vsel %vm71, %v65, 0
    %v94 = vsel %vm71, %v66, 0
    %96 = vmatprep.subr.mxu0 0.0
    %97 = vmatpush1.msra.mxu0 0.0
    %98 = vmatprep.subr.mxu0 0.0
    %99 = vmatpush1.msra.mxu0 0.0
    %100 = vmatprep.subr.mxu0 0.0
    %101 = vmatpush1.msra.mxu0 0.0
    %102 = vmatprep.subr.mxu0 0.0
    %103 = vmatpush1.msra.mxu0 0.0
    %104 = vmatprep.subr.mxu0 0.0
    %105 = vmatpush1.msra.mxu0 0.0
    %106 = vmatprep.subr.mxu0 0.0
    %107 = vmatpush1.msra.mxu0 0.0
    %108 = vmatprep.subr.mxu0 0.0
    %109 = vmatpush1.msra.mxu0 0.0
    %110 = vmatprep.subr.mxu0 0.0
    %111 = vmatpush1.msra.mxu0 0.0
    %112 = vmatprep.subr.mxu0 0.0
    %113 = vmatpush1.msra.mxu0 0.0
    %114 = vmatprep.subr.mxu0 0.0
    %115 = vmatpush1.msra.mxu0 0.0
    %116 = vmatprep.subr.mxu0 0.0
    %117 = vmatpush1.msra.mxu0 0.0
    %118 = vmatprep.subr.mxu0 0.0
    %119 = vmatpush1.msra.mxu0 0.0
    %120 = vmatprep.subr.mxu0 0.0
    %121 = vmatpush1.msra.mxu0 0.0
    %122 = vmatprep.subr.mxu0 0.0
    %123 = vmatpush1.msra.mxu0 0.0
    %124 = vmatprep.subr.mxu0 0.0
    %125 = vmatpush1.msra.mxu0 0.0
    %126 = vmatprep.subr.mxu0 0.0
    %127 = vmatpush1.msra.mxu0 %v53
    %128 = vmatprep.subr.mxu0 0.0
    %129 = vmatpush2.msra.mxu0 0.0
    %130 = vmatprep.subr.mxu0 0.0
    %131 = vmatpush2.msra.mxu0 0.0
    %132 = vmatprep.subr.mxu0 0.0
    %133 = vmatpush2.msra.mxu0 0.0
    %134 = vmatprep.subr.mxu0 0.0
    %135 = vmatpush2.msra.mxu0 0.0
    %136 = vmatprep.subr.mxu0 0.0
    %137 = vmatpush2.msra.mxu0 0.0
    %138 = vmatprep.subr.mxu0 0.0
    %139 = vmatpush2.msra.mxu0 0.0
    %140 = vmatprep.subr.mxu0 0.0
    %141 = vmatpush2.msra.mxu0 0.0
    %142 = vmatprep.subr.mxu0 0.0
    %143 = vmatpush2.msra.mxu0 0.0
    %144 = vmatprep.subr.mxu0 0.0
    %145 = vmatpush2.msra.mxu0 0.0
    %146 = vmatprep.subr.mxu0 0.0
    %147 = vmatpush2.msra.mxu0 0.0
    %148 = vmatprep.subr.mxu0 0.0
    %149 = vmatpush2.msra.mxu0 0.0
    %150 = vmatprep.subr.mxu0 0.0
    %151 = vmatpush2.msra.mxu0 0.0
    %152 = vmatprep.subr.mxu0 0.0
    %153 = vmatpush2.msra.mxu0 0.0
    %154 = vmatprep.subr.mxu0 0.0
    %155 = vmatpush2.msra.mxu0 0.0
    %156 = vmatprep.subr.mxu0 0.0
    %157 = vmatpush2.msra.mxu0 0.0
    %158 = vmatprep.subr.mxu0 0.0
    %159 = vmatpush2.msra.mxu0 0.0
    %160 = vmatprep.mubr.f32.mxu0 0.0
    %161 = vmatmul.mubr.f32.gmra.mxu0 %v73
    %v162 = vpop.f32.mrf.mxu0
    %v163 = vadd.f32 %v70, %v162
    %v164 = vpop.f32.mrf.mxu0
    %165 = vmatprep.mubr.f32.mxu0 0.0
    %166 = vmatmul.mubr.f32.gmra.mxu0 %v76
    %v167 = vpop.f32.mrf.mxu0
    %v168 = vadd.f32 %v70, %v167
    %v169 = vpop.f32.mrf.mxu0
    %170 = vmatprep.mubr.f32.mxu0 0.0
    %171 = vmatmul.mubr.f32.gmra.mxu0 %v79
    %v172 = vpop.f32.mrf.mxu0
    %v173 = vadd.f32 %v70, %v172
    %v174 = vpop.f32.mrf.mxu0
    %175 = vmatprep.mubr.f32.mxu0 0.0
    %176 = vmatmul.mubr.f32.gmra.mxu0 %v82
    %v177 = vpop.f32.mrf.mxu0
    %v178 = vadd.f32 %v70, %v177
    %v179 = vpop.f32.mrf.mxu0
    %180 = vmatprep.mubr.f32.mxu0 0.0
    %181 = vmatmul.mubr.f32.gmra.mxu0 %v85
    %v182 = vpop.f32.mrf.mxu0
    %v183 = vadd.f32 %v70, %v182
    %v184 = vpop.f32.mrf.mxu0
    %185 = vmatprep.mubr.f32.mxu0 0.0
    %186 = vmatmul.mubr.f32.gmra.mxu0 %v88
    %v187 = vpop.f32.mrf.mxu0
    %v188 = vadd.f32 %v70, %v187
    %v189 = vpop.f32.mrf.mxu0
    %190 = vmatprep.mubr.f32.mxu0 0.0
    %191 = vmatmul.mubr.f32.gmra.mxu0 %v91
    %v192 = vpop.f32.mrf.mxu0
    %v193 = vadd.f32 %v70, %v192
    %v194 = vpop.f32.mrf.mxu0
    %195 = vmatprep.mubr.f32.mxu0 0.0
    %196 = vmatmul.mubr.f32.gmra.mxu0 %v94
    %v197 = vpop.f32.mrf.mxu0
    %v198 = vadd.f32 %v70, %v197
    %v199 = vpop.f32.mrf.mxu0
    %200 = vdwg.mxu0
    %201 = vst [vmem:[#allocation2] sm:$0xff] %v163
    %202 = vst [vmem:[#allocation2 + $0x8] sm:$0xff] %v168
    %203 = vst [vmem:[#allocation2 + $0x10] sm:$0xff] %v173
    %204 = vst [vmem:[#allocation2 + $0x18] sm:$0xff] %v178
    %205 = vst [vmem:[#allocation2 + $0x20] sm:$0xff] %v183
    %206 = vst [vmem:[#allocation2 + $0x28] sm:$0xff] %v188
    %207 = vst [vmem:[#allocation2 + $0x30] sm:$0xff] %v193
    %208 = vst [vmem:[#allocation2 + $0x38] sm:$0xff] %v198
    %v209 = vld [vmem:[#allocation2] sm:$0xff]
    %vm210 = vcmask 261120
    %v212 = vsel %vm210, 0.0, 0
    %214 = vmatprep.subr.mxu0 0.0
    %215 = vmatpush1.msra.mxu0 0.0
    %216 = vmatprep.subr.mxu0 0.0
    %217 = vmatpush1.msra.mxu0 0.0
    %218 = vmatprep.subr.mxu0 0.0
    %219 = vmatpush1.msra.mxu0 0.0
    %220 = vmatprep.subr.mxu0 0.0
    %221 = vmatpush1.msra.mxu0 0.0
    %222 = vmatprep.subr.mxu0 0.0
    %223 = vmatpush1.msra.mxu0 0.0
    %224 = vmatprep.subr.mxu0 0.0
    %225 = vmatpush1.msra.mxu0 0.0
    %226 = vmatprep.subr.mxu0 0.0
    %227 = vmatpush1.msra.mxu0 0.0
    %228 = vmatprep.subr.mxu0 0.0
    %229 = vmatpush1.msra.mxu0 0.0
    %230 = vmatprep.subr.mxu0 0.0
    %231 = vmatpush1.msra.mxu0 0.0
    %232 = vmatprep.subr.mxu0 0.0
    %233 = vmatpush1.msra.mxu0 0.0
    %234 = vmatprep.subr.mxu0 0.0
    %235 = vmatpush1.msra.mxu0 0.0
    %236 = vmatprep.subr.mxu0 0.0
    %237 = vmatpush1.msra.mxu0 0.0
    %238 = vmatprep.subr.mxu0 0.0
    %239 = vmatpush1.msra.mxu0 %v58
    %240 = vmatprep.subr.mxu0 0.0
    %241 = vmatpush1.msra.mxu0 %v57
    %242 = vmatprep.subr.mxu0 0.0
    %243 = vmatpush1.msra.mxu0 %v56
    %244 = vmatprep.subr.mxu0 0.0
    %245 = vmatpush1.msra.mxu0 %v55
    %246 = vmatprep.subr.mxu0 0.0
    %247 = vmatpush2.msra.mxu0 0.0
    %248 = vmatprep.subr.mxu0 0.0
    %249 = vmatpush2.msra.mxu0 0.0
    %250 = vmatprep.subr.mxu0 0.0
    %251 = vmatpush2.msra.mxu0 0.0
    %252 = vmatprep.subr.mxu0 0.0
    %253 = vmatpush2.msra.mxu0 0.0
    %254 = vmatprep.subr.mxu0 0.0
    %255 = vmatpush2.msra.mxu0 0.0
    %256 = vmatprep.subr.mxu0 0.0
    %257 = vmatpush2.msra.mxu0 0.0
    %258 = vmatprep.subr.mxu0 0.0
    %259 = vmatpush2.msra.mxu0 0.0
    %260 = vmatprep.subr.mxu0 0.0
    %261 = vmatpush2.msra.mxu0 0.0
    %262 = vmatprep.subr.mxu0 0.0
    %263 = vmatpush2.msra.mxu0 0.0
    %264 = vmatprep.subr.mxu0 0.0
    %265 = vmatpush2.msra.mxu0 0.0
    %266 = vmatprep.subr.mxu0 0.0
    %267 = vmatpush2.msra.mxu0 0.0
    %268 = vmatprep.subr.mxu0 0.0
    %269 = vmatpush2.msra.mxu0 0.0
    %270 = vmatprep.subr.mxu0 0.0
    %271 = vmatpush2.msra.mxu0 0.0
    %272 = vmatprep.subr.mxu0 0.0
    %273 = vmatpush2.msra.mxu0 0.0
    %274 = vmatprep.subr.mxu0 0.0
    %275 = vmatpush2.msra.mxu0 0.0
    %276 = vmatprep.subr.mxu0 0.0
    %277 = vmatpush2.msra.mxu0 0.0
    %278 = vmatprep.mubr.f32.mxu0 0.0
    %279 = vmatmul.mubr.f32.gmra.mxu0 %v212
    %v280 = vpop.f32.mrf.mxu0
    %v281 = vadd.f32 0.0, %v280
    %v282 = vpop.f32.mrf.mxu0
    %283 = vdwg.mxu0
    %v284 = vadd.f32 %v209, %v281
    %v285 = vxor.u32 %v284, 2147483648
    %v286 = vmul.f32 %v285, 1.442695
    %v287 = vpow.pop %v286
    %v288 = vadd.f32 %v287, 1.0
    %v289 = vrcp.pop %v288
    %v290 = vmul.f32 1.0, %v289
    %v291 = vmul.f32 %v290, 2.0
    %v292 = vsub.f32 %v291, 1.0
    %v293 = vmul.f32 %v290, 0.0
    %295 = vrot.lane.b32.xlu0 %v292, 64
    %v296 = vpop.permute.xlu0 %295
    %v298 = vmul.f32 %v290, %v296
    %300 = vrot.lane.b32.xlu0 %v298, 32
    %v301 = vpop.permute.xlu0 %300
    %v303 = vadd.f32 %v293, %v301
    %v304 = vtanh.pop %v303
    %306 = vrot.lane.b32.xlu0 %v304, 64
    %v307 = vpop.permute.xlu0 %306
    %v309 = vmul.f32 %v290, %v307
    %v310 = vld [vmem:[#allocation2 + $0x8] sm:$0xff]
    %312 = vrot.lane.b32.xlu0 %v309, 32
    %v313 = vpop.permute.xlu0 %312
    %v314 = vsel %vm210, %v313, 0
    %316 = vmatprep.subr.mxu0 0.0
    %317 = vmatpush1.msra.mxu0 0.0
    %318 = vmatprep.subr.mxu0 0.0
    %319 = vmatpush1.msra.mxu0 0.0
    %320 = vmatprep.subr.mxu0 0.0
    %321 = vmatpush1.msra.mxu0 0.0
    %322 = vmatprep.subr.mxu0 0.0
    %323 = vmatpush1.msra.mxu0 0.0
    %324 = vmatprep.subr.mxu0 0.0
    %325 = vmatpush1.msra.mxu0 0.0
    %326 = vmatprep.subr.mxu0 0.0
    %327 = vmatpush1.msra.mxu0 0.0
    %328 = vmatprep.subr.mxu0 0.0
    %329 = vmatpush1.msra.mxu0 0.0
    %330 = vmatprep.subr.mxu0 0.0
    %331 = vmatpush1.msra.mxu0 0.0
    %332 = vmatprep.subr.mxu0 0.0
    %333 = vmatpush1.msra.mxu0 0.0
    %334 = vmatprep.subr.mxu0 0.0
    %335 = vmatpush1.msra.mxu0 0.0
    %336 = vmatprep.subr.mxu0 0.0
    %337 = vmatpush1.msra.mxu0 0.0
    %338 = vmatprep.subr.mxu0 0.0
    %339 = vmatpush1.msra.mxu0 0.0
    %340 = vmatprep.subr.mxu0 0.0
    %341 = vmatpush1.msra.mxu0 %v58
    %342 = vmatprep.subr.mxu0 0.0
    %343 = vmatpush1.msra.mxu0 %v57
    %344 = vmatprep.subr.mxu0 0.0
    %345 = vmatpush1.msra.mxu0 %v56
    %346 = vmatprep.subr.mxu0 0.0
    %347 = vmatpush1.msra.mxu0 %v55
    %348 = vmatprep.subr.mxu0 0.0
    %349 = vmatpush2.msra.mxu0 0.0
    %350 = vmatprep.subr.mxu0 0.0
    %351 = vmatpush2.msra.mxu0 0.0
    %352 = vmatprep.subr.mxu0 0.0
    %353 = vmatpush2.msra.mxu0 0.0
    %354 = vmatprep.subr.mxu0 0.0
    %355 = vmatpush2.msra.mxu0 0.0
    %356 = vmatprep.subr.mxu0 0.0
    %357 = vmatpush2.msra.mxu0 0.0
    %358 = vmatprep.subr.mxu0 0.0
    %359 = vmatpush2.msra.mxu0 0.0
    %360 = vmatprep.subr.mxu0 0.0
    %361 = vmatpush2.msra.mxu0 0.0
    %362 = vmatprep.subr.mxu0 0.0
    %363 = vmatpush2.msra.mxu0 0.0
    %364 = vmatprep.subr.mxu0 0.0
    %365 = vmatpush2.msra.mxu0 0.0
    %366 = vmatprep.subr.mxu0 0.0
    %367 = vmatpush2.msra.mxu0 0.0
    %368 = vmatprep.subr.mxu0 0.0
    %369 = vmatpush2.msra.mxu0 0.0
    %370 = vmatprep.subr.mxu0 0.0
    %371 = vmatpush2.msra.mxu0 0.0
    %372 = vmatprep.subr.mxu0 0.0
    %373 = vmatpush2.msra.mxu0 0.0
    %374 = vmatprep.subr.mxu0 0.0
    %375 = vmatpush2.msra.mxu0 0.0
    %376 = vmatprep.subr.mxu0 0.0
    %377 = vmatpush2.msra.mxu0 0.0
    %378 = vmatprep.subr.mxu0 0.0
    %379 = vmatpush2.msra.mxu0 0.0
    %380 = vmatprep.mubr.f32.mxu0 0.0
    %381 = vmatmul.mubr.f32.gmra.mxu0 %v314
    %v382 = vpop.f32.mrf.mxu0
    %v383 = vadd.f32 0.0, %v382
    %v384 = vpop.f32.mrf.mxu0
    %385 = vdwg.mxu0
    %v386 = vadd.f32 %v310, %v383
    %v387 = vxor.u32 %v386, 2147483648
    %v388 = vmul.f32 %v387, 1.442695
    %v389 = vpow.pop %v388
    %v390 = vadd.f32 %v389, 1.0
    %v391 = vrcp.pop %v390
    %v392 = vmul.f32 1.0, %v391
    %v393 = vmul.f32 %v392, 2.0
    %v394 = vsub.f32 %v393, 1.0
    %v395 = vmul.f32 %v392, %v303
    %397 = vrot.lane.b32.xlu0 %v394, 64
    %v398 = vpop.permute.xlu0 %397
    %v400 = vmul.f32 %v392, %v398
    %402 = vrot.lane.b32.xlu0 %v400, 32
    %v403 = vpop.permute.xlu0 %402
    %v405 = vadd.f32 %v395, %v403
    %v406 = vtanh.pop %v405
    %408 = vrot.lane.b32.xlu0 %v406, 64
    %v409 = vpop.permute.xlu0 %408
    %v411 = vmul.f32 %v392, %v409
    %v412 = vld [vmem:[#allocation2 + $0x10] sm:$0xff]
    %414 = vrot.lane.b32.xlu0 %v411, 32
    %v415 = vpop.permute.xlu0 %414
    %v416 = vsel %vm210, %v415, 0
    %418 = vmatprep.subr.mxu0 0.0
    %419 = vmatpush1.msra.mxu0 0.0
    %420 = vmatprep.subr.mxu0 0.0
    %421 = vmatpush1.msra.mxu0 0.0
    %422 = vmatprep.subr.mxu0 0.0
    %423 = vmatpush1.msra.mxu0 0.0
    %424 = vmatprep.subr.mxu0 0.0
    %425 = vmatpush1.msra.mxu0 0.0
    %426 = vmatprep.subr.mxu0 0.0
    %427 = vmatpush1.msra.mxu0 0.0
    %428 = vmatprep.subr.mxu0 0.0
    %429 = vmatpush1.msra.mxu0 0.0
    %430 = vmatprep.subr.mxu0 0.0
    %431 = vmatpush1.msra.mxu0 0.0
    %432 = vmatprep.subr.mxu0 0.0
    %433 = vmatpush1.msra.mxu0 0.0
    %434 = vmatprep.subr.mxu0 0.0
    %435 = vmatpush1.msra.mxu0 0.0
    %436 = vmatprep.subr.mxu0 0.0
    %437 = vmatpush1.msra.mxu0 0.0
    %438 = vmatprep.subr.mxu0 0.0
    %439 = vmatpush1.msra.mxu0 0.0
    %440 = vmatprep.subr.mxu0 0.0
    %441 = vmatpush1.msra.mxu0 0.0
    %442 = vmatprep.subr.mxu0 0.0
    %443 = vmatpush1.msra.mxu0 %v58
    %444 = vmatprep.subr.mxu0 0.0
    %445 = vmatpush1.msra.mxu0 %v57
    %446 = vmatprep.subr.mxu0 0.0
    %447 = vmatpush1.msra.mxu0 %v56
    %448 = vmatprep.subr.mxu0 0.0
    %449 = vmatpush1.msra.mxu0 %v55
    %450 = vmatprep.subr.mxu0 0.0
    %451 = vmatpush2.msra.mxu0 0.0
    %452 = vmatprep.subr.mxu0 0.0
    %453 = vmatpush2.msra.mxu0 0.0
    %454 = vmatprep.subr.mxu0 0.0
    %455 = vmatpush2.msra.mxu0 0.0
    %456 = vmatprep.subr.mxu0 0.0
    %457 = vmatpush2.msra.mxu0 0.0
    %458 = vmatprep.subr.mxu0 0.0
    %459 = vmatpush2.msra.mxu0 0.0
    %460 = vmatprep.subr.mxu0 0.0
    %461 = vmatpush2.msra.mxu0 0.0
    %462 = vmatprep.subr.mxu0 0.0
    %463 = vmatpush2.msra.mxu0 0.0
    %464 = vmatprep.subr.mxu0 0.0
    %465 = vmatpush2.msra.mxu0 0.0
    %466 = vmatprep.subr.mxu0 0.0
    %467 = vmatpush2.msra.mxu0 0.0
    %468 = vmatprep.subr.mxu0 0.0
    %469 = vmatpush2.msra.mxu0 0.0
    %470 = vmatprep.subr.mxu0 0.0
    %471 = vmatpush2.msra.mxu0 0.0
    %472 = vmatprep.subr.mxu0 0.0
    %473 = vmatpush2.msra.mxu0 0.0
    %474 = vmatprep.subr.mxu0 0.0
    %475 = vmatpush2.msra.mxu0 0.0
    %476 = vmatprep.subr.mxu0 0.0
    %477 = vmatpush2.msra.mxu0 0.0
    %478 = vmatprep.subr.mxu0 0.0
    %479 = vmatpush2.msra.mxu0 0.0
    %480 = vmatprep.subr.mxu0 0.0
    %481 = vmatpush2.msra.mxu0 0.0
    %482 = vmatprep.mubr.f32.mxu0 0.0
    %483 = vmatmul.mubr.f32.gmra.mxu0 %v416
    %v484 = vpop.f32.mrf.mxu0
    %v485 = vadd.f32 0.0, %v484
    %v486 = vpop.f32.mrf.mxu0
    %487 = vdwg.mxu0
    %v488 = vadd.f32 %v412, %v485
    %v489 = vxor.u32 %v488, 2147483648
    %v490 = vmul.f32 %v489, 1.442695
    %v491 = vpow.pop %v490
    %v492 = vadd.f32 %v491, 1.0
    %v493 = vrcp.pop %v492
    %v494 = vmul.f32 1.0, %v493
    %v495 = vmul.f32 %v494, 2.0
    %v496 = vsub.f32 %v495, 1.0
    %v497 = vmul.f32 %v494, %v405
    %499 = vrot.lane.b32.xlu0 %v496, 64
    %v500 = vpop.permute.xlu0 %499
    %v502 = vmul.f32 %v494, %v500
    %504 = vrot.lane.b32.xlu0 %v502, 32
    %v505 = vpop.permute.xlu0 %504
    %v507 = vadd.f32 %v497, %v505
    %v508 = vtanh.pop %v507
    %510 = vrot.lane.b32.xlu0 %v508, 64
    %v511 = vpop.permute.xlu0 %510
    %v513 = vmul.f32 %v494, %v511
    %v514 = vld [vmem:[#allocation2 + $0x18] sm:$0xff]
    %516 = vrot.lane.b32.xlu0 %v513, 32
    %v517 = vpop.permute.xlu0 %516
    %v518 = vsel %vm210, %v517, 0
    %520 = vmatprep.subr.mxu0 0.0
    %521 = vmatpush1.msra.mxu0 0.0
    %522 = vmatprep.subr.mxu0 0.0
    %523 = vmatpush1.msra.mxu0 0.0
    %524 = vmatprep.subr.mxu0 0.0
    %525 = vmatpush1.msra.mxu0 0.0
    %526 = vmatprep.subr.mxu0 0.0
    %527 = vmatpush1.msra.mxu0 0.0
    %528 = vmatprep.subr.mxu0 0.0
    %529 = vmatpush1.msra.mxu0 0.0
    %530 = vmatprep.subr.mxu0 0.0
    %531 = vmatpush1.msra.mxu0 0.0
    %532 = vmatprep.subr.mxu0 0.0
    %533 = vmatpush1.msra.mxu0 0.0
    %534 = vmatprep.subr.mxu0 0.0
    %535 = vmatpush1.msra.mxu0 0.0
    %536 = vmatprep.subr.mxu0 0.0
    %537 = vmatpush1.msra.mxu0 0.0
    %538 = vmatprep.subr.mxu0 0.0
    %539 = vmatpush1.msra.mxu0 0.0
    %540 = vmatprep.subr.mxu0 0.0
    %541 = vmatpush1.msra.mxu0 0.0
    %542 = vmatprep.subr.mxu0 0.0
    %543 = vmatpush1.msra.mxu0 0.0
    %544 = vmatprep.subr.mxu0 0.0
    %545 = vmatpush1.msra.mxu0 %v58
    %546 = vmatprep.subr.mxu0 0.0
    %547 = vmatpush1.msra.mxu0 %v57
    %548 = vmatprep.subr.mxu0 0.0
    %549 = vmatpush1.msra.mxu0 %v56
    %550 = vmatprep.subr.mxu0 0.0
    %551 = vmatpush1.msra.mxu0 %v55
    %552 = vmatprep.subr.mxu0 0.0
    %553 = vmatpush2.msra.mxu0 0.0
    %554 = vmatprep.subr.mxu0 0.0
    %555 = vmatpush2.msra.mxu0 0.0
    %556 = vmatprep.subr.mxu0 0.0
    %557 = vmatpush2.msra.mxu0 0.0
    %558 = vmatprep.subr.mxu0 0.0
    %559 = vmatpush2.msra.mxu0 0.0
    %560 = vmatprep.subr.mxu0 0.0
    %561 = vmatpush2.msra.mxu0 0.0
    %562 = vmatprep.subr.mxu0 0.0
    %563 = vmatpush2.msra.mxu0 0.0
    %564 = vmatprep.subr.mxu0 0.0
    %565 = vmatpush2.msra.mxu0 0.0
    %566 = vmatprep.subr.mxu0 0.0
    %567 = vmatpush2.msra.mxu0 0.0
    %568 = vmatprep.subr.mxu0 0.0
    %569 = vmatpush2.msra.mxu0 0.0
    %570 = vmatprep.subr.mxu0 0.0
    %571 = vmatpush2.msra.mxu0 0.0
    %572 = vmatprep.subr.mxu0 0.0
    %573 = vmatpush2.msra.mxu0 0.0
    %574 = vmatprep.subr.mxu0 0.0
    %575 = vmatpush2.msra.mxu0 0.0
    %576 = vmatprep.subr.mxu0 0.0
    %577 = vmatpush2.msra.mxu0 0.0
    %578 = vmatprep.subr.mxu0 0.0
    %579 = vmatpush2.msra.mxu0 0.0
    %580 = vmatprep.subr.mxu0 0.0
    %581 = vmatpush2.msra.mxu0 0.0
    %582 = vmatprep.subr.mxu0 0.0
    %583 = vmatpush2.msra.mxu0 0.0
    %584 = vmatprep.mubr.f32.mxu0 0.0
    %585 = vmatmul.mubr.f32.gmra.mxu0 %v518
    %v586 = vpop.f32.mrf.mxu0
    %v587 = vadd.f32 0.0, %v586
    %v588 = vpop.f32.mrf.mxu0
    %589 = vdwg.mxu0
    %v590 = vadd.f32 %v514, %v587
    %v591 = vxor.u32 %v590, 2147483648
    %v592 = vmul.f32 %v591, 1.442695
    %v593 = vpow.pop %v592
    %v594 = vadd.f32 %v593, 1.0
    %v595 = vrcp.pop %v594
    %v596 = vmul.f32 1.0, %v595
    %v597 = vmul.f32 %v596, 2.0
    %v598 = vsub.f32 %v597, 1.0
    %v599 = vmul.f32 %v596, %v507
    %601 = vrot.lane.b32.xlu0 %v598, 64
    %v602 = vpop.permute.xlu0 %601
    %v604 = vmul.f32 %v596, %v602
    %606 = vrot.lane.b32.xlu0 %v604, 32
    %v607 = vpop.permute.xlu0 %606
    %v609 = vadd.f32 %v599, %v607
    %v610 = vtanh.pop %v609
    %612 = vrot.lane.b32.xlu0 %v610, 64
    %v613 = vpop.permute.xlu0 %612
    %v615 = vmul.f32 %v596, %v613
    %v616 = vld [vmem:[#allocation2 + $0x20] sm:$0xff]
    %618 = vrot.lane.b32.xlu0 %v615, 32
    %v619 = vpop.permute.xlu0 %618
    %v620 = vsel %vm210, %v619, 0
    %622 = vmatprep.subr.mxu0 0.0
    %623 = vmatpush1.msra.mxu0 0.0
    %624 = vmatprep.subr.mxu0 0.0
    %625 = vmatpush1.msra.mxu0 0.0
    %626 = vmatprep.subr.mxu0 0.0
    %627 = vmatpush1.msra.mxu0 0.0
    %628 = vmatprep.subr.mxu0 0.0
    %629 = vmatpush1.msra.mxu0 0.0
    %630 = vmatprep.subr.mxu0 0.0
    %631 = vmatpush1.msra.mxu0 0.0
    %632 = vmatprep.subr.mxu0 0.0
    %633 = vmatpush1.msra.mxu0 0.0
    %634 = vmatprep.subr.mxu0 0.0
    %635 = vmatpush1.msra.mxu0 0.0
    %636 = vmatprep.subr.mxu0 0.0
    %637 = vmatpush1.msra.mxu0 0.0
    %638 = vmatprep.subr.mxu0 0.0
    %639 = vmatpush1.msra.mxu0 0.0
    %640 = vmatprep.subr.mxu0 0.0
    %641 = vmatpush1.msra.mxu0 0.0
    %642 = vmatprep.subr.mxu0 0.0
    %643 = vmatpush1.msra.mxu0 0.0
    %644 = vmatprep.subr.mxu0 0.0
    %645 = vmatpush1.msra.mxu0 0.0
    %646 = vmatprep.subr.mxu0 0.0
    %647 = vmatpush1.msra.mxu0 %v58
    %648 = vmatprep.subr.mxu0 0.0
    %649 = vmatpush1.msra.mxu0 %v57
    %650 = vmatprep.subr.mxu0 0.0
    %651 = vmatpush1.msra.mxu0 %v56
    %652 = vmatprep.subr.mxu0 0.0
    %653 = vmatpush1.msra.mxu0 %v55
    %654 = vmatprep.subr.mxu0 0.0
    %655 = vmatpush2.msra.mxu0 0.0
    %656 = vmatprep.subr.mxu0 0.0
    %657 = vmatpush2.msra.mxu0 0.0
    %658 = vmatprep.subr.mxu0 0.0
    %659 = vmatpush2.msra.mxu0 0.0
    %660 = vmatprep.subr.mxu0 0.0
    %661 = vmatpush2.msra.mxu0 0.0
    %662 = vmatprep.subr.mxu0 0.0
    %663 = vmatpush2.msra.mxu0 0.0
    %664 = vmatprep.subr.mxu0 0.0
    %665 = vmatpush2.msra.mxu0 0.0
    %666 = vmatprep.subr.mxu0 0.0
    %667 = vmatpush2.msra.mxu0 0.0
    %668 = vmatprep.subr.mxu0 0.0
    %669 = vmatpush2.msra.mxu0 0.0
    %670 = vmatprep.subr.mxu0 0.0
    %671 = vmatpush2.msra.mxu0 0.0
    %672 = vmatprep.subr.mxu0 0.0
    %673 = vmatpush2.msra.mxu0 0.0
    %674 = vmatprep.subr.mxu0 0.0
    %675 = vmatpush2.msra.mxu0 0.0
    %676 = vmatprep.subr.mxu0 0.0
    %677 = vmatpush2.msra.mxu0 0.0
    %678 = vmatprep.subr.mxu0 0.0
    %679 = vmatpush2.msra.mxu0 0.0
    %680 = vmatprep.subr.mxu0 0.0
    %681 = vmatpush2.msra.mxu0 0.0
    %682 = vmatprep.subr.mxu0 0.0
    %683 = vmatpush2.msra.mxu0 0.0
    %684 = vmatprep.subr.mxu0 0.0
    %685 = vmatpush2.msra.mxu0 0.0
    %686 = vmatprep.mubr.f32.mxu0 0.0
    %687 = vmatmul.mubr.f32.gmra.mxu0 %v620
    %v688 = vpop.f32.mrf.mxu0
    %v689 = vadd.f32 0.0, %v688
    %v690 = vpop.f32.mrf.mxu0
    %691 = vdwg.mxu0
    %v692 = vadd.f32 %v616, %v689
    %v693 = vxor.u32 %v692, 2147483648
    %v694 = vmul.f32 %v693, 1.442695
    %v695 = vpow.pop %v694
    %v696 = vadd.f32 %v695, 1.0
    %v697 = vrcp.pop %v696
    %v698 = vmul.f32 1.0, %v697
    %v699 = vmul.f32 %v698, 2.0
    %v700 = vsub.f32 %v699, 1.0
    %v701 = vmul.f32 %v698, %v609
    %703 = vrot.lane.b32.xlu0 %v700, 64
    %v704 = vpop.permute.xlu0 %703
    %v706 = vmul.f32 %v698, %v704
    %708 = vrot.lane.b32.xlu0 %v706, 32
    %v709 = vpop.permute.xlu0 %708
    %v711 = vadd.f32 %v701, %v709
    %v712 = vtanh.pop %v711
    %714 = vrot.lane.b32.xlu0 %v712, 64
    %v715 = vpop.permute.xlu0 %714
    %v717 = vmul.f32 %v698, %v715
    %v718 = vld [vmem:[#allocation2 + $0x28] sm:$0xff]
    %720 = vrot.lane.b32.xlu0 %v717, 32
    %v721 = vpop.permute.xlu0 %720
    %v722 = vsel %vm210, %v721, 0
    %724 = vmatprep.subr.mxu0 0.0
    %725 = vmatpush1.msra.mxu0 0.0
    %726 = vmatprep.subr.mxu0 0.0
    %727 = vmatpush1.msra.mxu0 0.0
    %728 = vmatprep.subr.mxu0 0.0
    %729 = vmatpush1.msra.mxu0 0.0
    %730 = vmatprep.subr.mxu0 0.0
    %731 = vmatpush1.msra.mxu0 0.0
    %732 = vmatprep.subr.mxu0 0.0
    %733 = vmatpush1.msra.mxu0 0.0
    %734 = vmatprep.subr.mxu0 0.0
    %735 = vmatpush1.msra.mxu0 0.0
    %736 = vmatprep.subr.mxu0 0.0
    %737 = vmatpush1.msra.mxu0 0.0
    %738 = vmatprep.subr.mxu0 0.0
    %739 = vmatpush1.msra.mxu0 0.0
    %740 = vmatprep.subr.mxu0 0.0
    %741 = vmatpush1.msra.mxu0 0.0
    %742 = vmatprep.subr.mxu0 0.0
    %743 = vmatpush1.msra.mxu0 0.0
    %744 = vmatprep.subr.mxu0 0.0
    %745 = vmatpush1.msra.mxu0 0.0
    %746 = vmatprep.subr.mxu0 0.0
    %747 = vmatpush1.msra.mxu0 0.0
    %748 = vmatprep.subr.mxu0 0.0
    %749 = vmatpush1.msra.mxu0 %v58
    %750 = vmatprep.subr.mxu0 0.0
    %751 = vmatpush1.msra.mxu0 %v57
    %752 = vmatprep.subr.mxu0 0.0
    %753 = vmatpush1.msra.mxu0 %v56
    %754 = vmatprep.subr.mxu0 0.0
    %755 = vmatpush1.msra.mxu0 %v55
    %756 = vmatprep.subr.mxu0 0.0
    %757 = vmatpush2.msra.mxu0 0.0
    %758 = vmatprep.subr.mxu0 0.0
    %759 = vmatpush2.msra.mxu0 0.0
    %760 = vmatprep.subr.mxu0 0.0
    %761 = vmatpush2.msra.mxu0 0.0
    %762 = vmatprep.subr.mxu0 0.0
    %763 = vmatpush2.msra.mxu0 0.0
    %764 = vmatprep.subr.mxu0 0.0
    %765 = vmatpush2.msra.mxu0 0.0
    %766 = vmatprep.subr.mxu0 0.0
    %767 = vmatpush2.msra.mxu0 0.0
    %768 = vmatprep.subr.mxu0 0.0
    %769 = vmatpush2.msra.mxu0 0.0
    %770 = vmatprep.subr.mxu0 0.0
    %771 = vmatpush2.msra.mxu0 0.0
    %772 = vmatprep.subr.mxu0 0.0
    %773 = vmatpush2.msra.mxu0 0.0
    %774 = vmatprep.subr.mxu0 0.0
    %775 = vmatpush2.msra.mxu0 0.0
    %776 = vmatprep.subr.mxu0 0.0
    %777 = vmatpush2.msra.mxu0 0.0
    %778 = vmatprep.subr.mxu0 0.0
    %779 = vmatpush2.msra.mxu0 0.0
    %780 = vmatprep.subr.mxu0 0.0
    %781 = vmatpush2.msra.mxu0 0.0
    %782 = vmatprep.subr.mxu0 0.0
    %783 = vmatpush2.msra.mxu0 0.0
    %784 = vmatprep.subr.mxu0 0.0
    %785 = vmatpush2.msra.mxu0 0.0
    %786 = vmatprep.subr.mxu0 0.0
    %787 = vmatpush2.msra.mxu0 0.0
    %788 = vmatprep.mubr.f32.mxu0 0.0
    %789 = vmatmul.mubr.f32.gmra.mxu0 %v722
    %v790 = vpop.f32.mrf.mxu0
    %v791 = vadd.f32 0.0, %v790
    %v792 = vpop.f32.mrf.mxu0
    %793 = vdwg.mxu0
    %v794 = vadd.f32 %v718, %v791
    %v795 = vxor.u32 %v794, 2147483648
    %v796 = vmul.f32 %v795, 1.442695
    %v797 = vpow.pop %v796
    %v798 = vadd.f32 %v797, 1.0
    %v799 = vrcp.pop %v798
    %v800 = vmul.f32 1.0, %v799
    %v801 = vmul.f32 %v800, 2.0
    %v802 = vsub.f32 %v801, 1.0
    %v803 = vmul.f32 %v800, %v711
    %805 = vrot.lane.b32.xlu0 %v802, 64
    %v806 = vpop.permute.xlu0 %805
    %v808 = vmul.f32 %v800, %v806
    %810 = vrot.lane.b32.xlu0 %v808, 32
    %v811 = vpop.permute.xlu0 %810
    %v813 = vadd.f32 %v803, %v811
    %v814 = vtanh.pop %v813
    %816 = vrot.lane.b32.xlu0 %v814, 64
    %v817 = vpop.permute.xlu0 %816
    %v819 = vmul.f32 %v800, %v817
    %v820 = vld [vmem:[#allocation2 + $0x30] sm:$0xff]
    %822 = vrot.lane.b32.xlu0 %v819, 32
    %v823 = vpop.permute.xlu0 %822
    %v824 = vsel %vm210, %v823, 0
    %826 = vmatprep.subr.mxu0 0.0
    %827 = vmatpush1.msra.mxu0 0.0
    %828 = vmatprep.subr.mxu0 0.0
    %829 = vmatpush1.msra.mxu0 0.0
    %830 = vmatprep.subr.mxu0 0.0
    %831 = vmatpush1.msra.mxu0 0.0
    %832 = vmatprep.subr.mxu0 0.0
    %833 = vmatpush1.msra.mxu0 0.0
    %834 = vmatprep.subr.mxu0 0.0
    %835 = vmatpush1.msra.mxu0 0.0
    %836 = vmatprep.subr.mxu0 0.0
    %837 = vmatpush1.msra.mxu0 0.0
    %838 = vmatprep.subr.mxu0 0.0
    %839 = vmatpush1.msra.mxu0 0.0
    %840 = vmatprep.subr.mxu0 0.0
    %841 = vmatpush1.msra.mxu0 0.0
    %842 = vmatprep.subr.mxu0 0.0
    %843 = vmatpush1.msra.mxu0 0.0
    %844 = vmatprep.subr.mxu0 0.0
    %845 = vmatpush1.msra.mxu0 0.0
    %846 = vmatprep.subr.mxu0 0.0
    %847 = vmatpush1.msra.mxu0 0.0
    %848 = vmatprep.subr.mxu0 0.0
    %849 = vmatpush1.msra.mxu0 0.0
    %850 = vmatprep.subr.mxu0 0.0
    %851 = vmatpush1.msra.mxu0 %v58
    %852 = vmatprep.subr.mxu0 0.0
    %853 = vmatpush1.msra.mxu0 %v57
    %854 = vmatprep.subr.mxu0 0.0
    %855 = vmatpush1.msra.mxu0 %v56
    %856 = vmatprep.subr.mxu0 0.0
    %857 = vmatpush1.msra.mxu0 %v55
    %858 = vmatprep.subr.mxu0 0.0
    %859 = vmatpush2.msra.mxu0 0.0
    %860 = vmatprep.subr.mxu0 0.0
    %861 = vmatpush2.msra.mxu0 0.0
    %862 = vmatprep.subr.mxu0 0.0
    %863 = vmatpush2.msra.mxu0 0.0
    %864 = vmatprep.subr.mxu0 0.0
    %865 = vmatpush2.msra.mxu0 0.0
    %866 = vmatprep.subr.mxu0 0.0
    %867 = vmatpush2.msra.mxu0 0.0
    %868 = vmatprep.subr.mxu0 0.0
    %869 = vmatpush2.msra.mxu0 0.0
    %870 = vmatprep.subr.mxu0 0.0
    %871 = vmatpush2.msra.mxu0 0.0
    %872 = vmatprep.subr.mxu0 0.0
    %873 = vmatpush2.msra.mxu0 0.0
    %874 = vmatprep.subr.mxu0 0.0
    %875 = vmatpush2.msra.mxu0 0.0
    %876 = vmatprep.subr.mxu0 0.0
    %877 = vmatpush2.msra.mxu0 0.0
    %878 = vmatprep.subr.mxu0 0.0
    %879 = vmatpush2.msra.mxu0 0.0
    %880 = vmatprep.subr.mxu0 0.0
    %881 = vmatpush2.msra.mxu0 0.0
    %882 = vmatprep.subr.mxu0 0.0
    %883 = vmatpush2.msra.mxu0 0.0
    %884 = vmatprep.subr.mxu0 0.0
    %885 = vmatpush2.msra.mxu0 0.0
    %886 = vmatprep.subr.mxu0 0.0
    %887 = vmatpush2.msra.mxu0 0.0
    %888 = vmatprep.subr.mxu0 0.0
    %889 = vmatpush2.msra.mxu0 0.0
    %890 = vmatprep.mubr.f32.mxu0 0.0
    %891 = vmatmul.mubr.f32.gmra.mxu0 %v824
    %v892 = vpop.f32.mrf.mxu0
    %v893 = vadd.f32 0.0, %v892
    %v894 = vpop.f32.mrf.mxu0
    %895 = vdwg.mxu0
    %v896 = vadd.f32 %v820, %v893
    %v897 = vxor.u32 %v896, 2147483648
    %v898 = vmul.f32 %v897, 1.442695
    %v899 = vpow.pop %v898
    %v900 = vadd.f32 %v899, 1.0
    %v901 = vrcp.pop %v900
    %v902 = vmul.f32 1.0, %v901
    %v903 = vmul.f32 %v902, 2.0
    %v904 = vsub.f32 %v903, 1.0
    %v905 = vmul.f32 %v902, %v813
    %907 = vrot.lane.b32.xlu0 %v904, 64
    %v908 = vpop.permute.xlu0 %907
    %v910 = vmul.f32 %v902, %v908
    %912 = vrot.lane.b32.xlu0 %v910, 32
    %v913 = vpop.permute.xlu0 %912
    %v915 = vadd.f32 %v905, %v913
    %v916 = vtanh.pop %v915
    %918 = vrot.lane.b32.xlu0 %v916, 64
    %v919 = vpop.permute.xlu0 %918
    %v921 = vmul.f32 %v902, %v919
    %v922 = vld [vmem:[#allocation2 + $0x38] sm:$0xff]
    %924 = vrot.lane.b32.xlu0 %v921, 32
    %v925 = vpop.permute.xlu0 %924
    %v926 = vsel %vm210, %v925, 0
    %928 = vmatprep.subr.mxu0 0.0
    %929 = vmatpush1.msra.mxu0 0.0
    %930 = vmatprep.subr.mxu0 0.0
    %931 = vmatpush1.msra.mxu0 0.0
    %932 = vmatprep.subr.mxu0 0.0
    %933 = vmatpush1.msra.mxu0 0.0
    %934 = vmatprep.subr.mxu0 0.0
    %935 = vmatpush1.msra.mxu0 0.0
    %936 = vmatprep.subr.mxu0 0.0
    %937 = vmatpush1.msra.mxu0 0.0
    %938 = vmatprep.subr.mxu0 0.0
    %939 = vmatpush1.msra.mxu0 0.0
    %940 = vmatprep.subr.mxu0 0.0
    %941 = vmatpush1.msra.mxu0 0.0
    %942 = vmatprep.subr.mxu0 0.0
    %943 = vmatpush1.msra.mxu0 0.0
    %944 = vmatprep.subr.mxu0 0.0
    %945 = vmatpush1.msra.mxu0 0.0
    %946 = vmatprep.subr.mxu0 0.0
    %947 = vmatpush1.msra.mxu0 0.0
    %948 = vmatprep.subr.mxu0 0.0
    %949 = vmatpush1.msra.mxu0 0.0
    %950 = vmatprep.subr.mxu0 0.0
    %951 = vmatpush1.msra.mxu0 0.0
    %952 = vmatprep.subr.mxu0 0.0
    %953 = vmatpush1.msra.mxu0 %v58
    %954 = vmatprep.subr.mxu0 0.0
    %955 = vmatpush1.msra.mxu0 %v57
    %956 = vmatprep.subr.mxu0 0.0
    %957 = vmatpush1.msra.mxu0 %v56
    %958 = vmatprep.subr.mxu0 0.0
    %959 = vmatpush1.msra.mxu0 %v55
    %960 = vmatprep.subr.mxu0 0.0
    %961 = vmatpush2.msra.mxu0 0.0
    %962 = vmatprep.subr.mxu0 0.0
    %963 = vmatpush2.msra.mxu0 0.0
    %964 = vmatprep.subr.mxu0 0.0
    %965 = vmatpush2.msra.mxu0 0.0
    %966 = vmatprep.subr.mxu0 0.0
    %967 = vmatpush2.msra.mxu0 0.0
    %968 = vmatprep.subr.mxu0 0.0
    %969 = vmatpush2.msra.mxu0 0.0
    %970 = vmatprep.subr.mxu0 0.0
    %971 = vmatpush2.msra.mxu0 0.0
    %972 = vmatprep.subr.mxu0 0.0
    %973 = vmatpush2.msra.mxu0 0.0
    %974 = vmatprep.subr.mxu0 0.0
    %975 = vmatpush2.msra.mxu0 0.0
    %976 = vmatprep.subr.mxu0 0.0
    %977 = vmatpush2.msra.mxu0 0.0
    %978 = vmatprep.subr.mxu0 0.0
    %979 = vmatpush2.msra.mxu0 0.0
    %980 = vmatprep.subr.mxu0 0.0
    %981 = vmatpush2.msra.mxu0 0.0
    %982 = vmatprep.subr.mxu0 0.0
    %983 = vmatpush2.msra.mxu0 0.0
    %984 = vmatprep.subr.mxu0 0.0
    %985 = vmatpush2.msra.mxu0 0.0
    %986 = vmatprep.subr.mxu0 0.0
    %987 = vmatpush2.msra.mxu0 0.0
    %988 = vmatprep.subr.mxu0 0.0
    %989 = vmatpush2.msra.mxu0 0.0
    %990 = vmatprep.subr.mxu0 0.0
    %991 = vmatpush2.msra.mxu0 0.0
    %992 = vmatprep.mubr.f32.mxu0 0.0
    %993 = vmatmul.mubr.f32.gmra.mxu0 %v926
    %v994 = vpop.f32.mrf.mxu0
    %v995 = vadd.f32 0.0, %v994
    %v996 = vpop.f32.mrf.mxu0
    %997 = vdwg.mxu0
    %v998 = vadd.f32 %v922, %v995
    %v999 = vxor.u32 %v998, 2147483648
    %v1000 = vmul.f32 %v999, 1.442695
    %v1001 = vpow.pop %v1000
    %v1002 = vadd.f32 %v1001, 1.0
    %v1003 = vrcp.pop %v1002
    %v1004 = vmul.f32 1.0, %v1003
    %v1005 = vmul.f32 %v1004, 2.0
    %v1006 = vsub.f32 %v1005, 1.0
    %v1007 = vmul.f32 %v1004, %v915
    %1009 = vrot.lane.b32.xlu0 %v1006, 64
    %v1010 = vpop.permute.xlu0 %1009
    %v1012 = vmul.f32 %v1004, %v1010
    %1014 = vrot.lane.b32.xlu0 %v1012, 32
    %v1015 = vpop.permute.xlu0 %1014
    %v1017 = vadd.f32 %v1007, %v1015
    %v1018 = vtanh.pop %v1017
    %1020 = vrot.lane.b32.xlu0 %v1018, 64
    %v1021 = vpop.permute.xlu0 %1020
    %v1023 = vmul.f32 %v1004, %v1021
    %v1024 = vld [vmem:[#allocation5] sm:$0xff]
    %v1025 = vld [vmem:[#allocation7 + $0x30] sm:$0xff]
    %v1026 = vld [vmem:[#allocation7 + $0x38] sm:$0xff]
    %v1027 = vld [vmem:[#allocation7 + $0x40] sm:$0xff]
    %v1028 = vld [vmem:[#allocation7 + $0x48] sm:$0xff]
    %v1029 = vld [vmem:[#allocation7 + $0x50] sm:$0x1]
    %v1030 = vlaneseq
    %v1031 = vshrl.u32 %v1030, 7
    %v1032 = vsub.s32 0, %v1031
    %v1033 = vrot.slane %v1029, %v1032
    %1035 = vrot.lane.b32.xlu0 %v1023, 32
    %v1036 = vpop.permute.xlu0 %1035
    %v1037 = vsel %vm210, %v1036, 0
    %1039 = vmatprep.subr.mxu0 0.0
    %1040 = vmatpush1.msra.mxu0 0.0
    %1041 = vmatprep.subr.mxu0 0.0
    %1042 = vmatpush1.msra.mxu0 0.0
    %1043 = vmatprep.subr.mxu0 0.0
    %1044 = vmatpush1.msra.mxu0 0.0
    %1045 = vmatprep.subr.mxu0 0.0
    %1046 = vmatpush1.msra.mxu0 0.0
    %1047 = vmatprep.subr.mxu0 0.0
    %1048 = vmatpush1.msra.mxu0 0.0
    %1049 = vmatprep.subr.mxu0 0.0
    %1050 = vmatpush1.msra.mxu0 0.0
    %1051 = vmatprep.subr.mxu0 0.0
    %1052 = vmatpush1.msra.mxu0 0.0
    %1053 = vmatprep.subr.mxu0 0.0
    %1054 = vmatpush1.msra.mxu0 0.0
    %1055 = vmatprep.subr.mxu0 0.0
    %1056 = vmatpush1.msra.mxu0 0.0
    %1057 = vmatprep.subr.mxu0 0.0
    %1058 = vmatpush1.msra.mxu0 0.0
    %1059 = vmatprep.subr.mxu0 0.0
    %1060 = vmatpush1.msra.mxu0 0.0
    %1061 = vmatprep.subr.mxu0 0.0
    %1062 = vmatpush1.msra.mxu0 0.0
    %1063 = vmatprep.subr.mxu0 0.0
    %1064 = vmatpush1.msra.mxu0 %v1028
    %1065 = vmatprep.subr.mxu0 0.0
    %1066 = vmatpush1.msra.mxu0 %v1027
    %1067 = vmatprep.subr.mxu0 0.0
    %1068 = vmatpush1.msra.mxu0 %v1026
    %1069 = vmatprep.subr.mxu0 0.0
    %1070 = vmatpush1.msra.mxu0 %v1025
    %1071 = vmatprep.subr.mxu0 0.0
    %1072 = vmatpush2.msra.mxu0 0.0
    %1073 = vmatprep.subr.mxu0 0.0
    %1074 = vmatpush2.msra.mxu0 0.0
    %1075 = vmatprep.subr.mxu0 0.0
    %1076 = vmatpush2.msra.mxu0 0.0
    %1077 = vmatprep.subr.mxu0 0.0
    %1078 = vmatpush2.msra.mxu0 0.0
    %1079 = vmatprep.subr.mxu0 0.0
    %1080 = vmatpush2.msra.mxu0 0.0
    %1081 = vmatprep.subr.mxu0 0.0
    %1082 = vmatpush2.msra.mxu0 0.0
    %1083 = vmatprep.subr.mxu0 0.0
    %1084 = vmatpush2.msra.mxu0 0.0
    %1085 = vmatprep.subr.mxu0 0.0
    %1086 = vmatpush2.msra.mxu0 0.0
    %1087 = vmatprep.subr.mxu0 0.0
    %1088 = vmatpush2.msra.mxu0 0.0
    %1089 = vmatprep.subr.mxu0 0.0
    %1090 = vmatpush2.msra.mxu0 0.0
    %1091 = vmatprep.subr.mxu0 0.0
    %1092 = vmatpush2.msra.mxu0 0.0
    %1093 = vmatprep.subr.mxu0 0.0
    %1094 = vmatpush2.msra.mxu0 0.0
    %1095 = vmatprep.subr.mxu0 0.0
    %1096 = vmatpush2.msra.mxu0 0.0
    %1097 = vmatprep.subr.mxu0 0.0
    %1098 = vmatpush2.msra.mxu0 0.0
    %1099 = vmatprep.subr.mxu0 0.0
    %1100 = vmatpush2.msra.mxu0 0.0
    %1101 = vmatprep.subr.mxu0 0.0
    %1102 = vmatpush2.msra.mxu0 0.0
    %1103 = vmatprep.mubr.f32.mxu0 0.0
    %1104 = vmatmul.mubr.f32.gmra.mxu0 %v1037
    %v1105 = vpop.f32.mrf.mxu0
    %v1106 = vadd.f32 %v1033, %v1105
    %v1107 = vpop.f32.mrf.mxu0
    %1108 = vdwg.mxu0
    %v1109 = vmax.f32 %v1106, 0.0
    %v1110 = vld [vmem:[#allocation7 + $0x58] sm:$0xff]
    %v1111 = vld [vmem:[#allocation7 + $0x60] sm:$0xff]
    %v1112 = vld [vmem:[#allocation7 + $0x68] sm:$0xff]
    %v1113 = vld [vmem:[#allocation7 + $0x70] sm:$0xff]
    %v1114 = vld [vmem:[#allocation7 + $0x78] sm:$0xff]
    %v1115 = vld [vmem:[#allocation7 + $0x80] sm:$0xff]
    %v1116 = vld [vmem:[#allocation7 + $0x88] sm:$0xff]
    %v1117 = vld [vmem:[#allocation7 + $0x90] sm:$0xff]
    %v1118 = vld [vmem:[#allocation7 + $0x98] sm:$0xff]
    %v1119 = vld [vmem:[#allocation7 + $0xa0] sm:$0xff]
    %v1120 = vld [vmem:[#allocation7 + $0xa8] sm:$0xff]
    %v1121 = vld [vmem:[#allocation7 + $0xb0] sm:$0xff]
    %v1122 = vld [vmem:[#allocation7 + $0xb8] sm:$0xff]
    %v1123 = vld [vmem:[#allocation7 + $0xc0] sm:$0xff]
    %v1124 = vld [vmem:[#allocation7 + $0xc8] sm:$0xff]
    %v1125 = vld [vmem:[#allocation7 + $0xd0] sm:$0xff]
    %v1126 = vld [vmem:[#allocation7 + $0xd8] sm:$0x1]
    %v1127 = vlaneseq
    %v1128 = vshrl.u32 %v1127, 7
    %v1129 = vsub.s32 0, %v1128
    %v1130 = vrot.slane %v1126, %v1129
    %1131 = vmatprep.subr.mxu0 0.0
    %1132 = vmatpush1.msra.mxu0 %v1125
    %1133 = vmatprep.subr.mxu0 0.0
    %1134 = vmatpush1.msra.mxu0 %v1124
    %1135 = vmatprep.subr.mxu0 0.0
    %1136 = vmatpush1.msra.mxu0 %v1123
    %1137 = vmatprep.subr.mxu0 0.0
    %1138 = vmatpush1.msra.mxu0 %v1122
    %1139 = vmatprep.subr.mxu0 0.0
    %1140 = vmatpush1.msra.mxu0 %v1121
    %1141 = vmatprep.subr.mxu0 0.0
    %1142 = vmatpush1.msra.mxu0 %v1120
    %1143 = vmatprep.subr.mxu0 0.0
    %1144 = vmatpush1.msra.mxu0 %v1119
    %1145 = vmatprep.subr.mxu0 0.0
    %1146 = vmatpush1.msra.mxu0 %v1118
    %1147 = vmatprep.subr.mxu0 0.0
    %1148 = vmatpush1.msra.mxu0 %v1117
    %1149 = vmatprep.subr.mxu0 0.0
    %1150 = vmatpush1.msra.mxu0 %v1116
    %1151 = vmatprep.subr.mxu0 0.0
    %1152 = vmatpush1.msra.mxu0 %v1115
    %1153 = vmatprep.subr.mxu0 0.0
    %1154 = vmatpush1.msra.mxu0 %v1114
    %1155 = vmatprep.subr.mxu0 0.0
    %1156 = vmatpush1.msra.mxu0 %v1113
    %1157 = vmatprep.subr.mxu0 0.0
    %1158 = vmatpush1.msra.mxu0 %v1112
    %1159 = vmatprep.subr.mxu0 0.0
    %1160 = vmatpush1.msra.mxu0 %v1111
    %1161 = vmatprep.subr.mxu0 0.0
    %1162 = vmatpush1.msra.mxu0 %v1110
    %1163 = vmatprep.subr.mxu0 0.0
    %1164 = vmatpush2.msra.mxu0 0.0
    %1165 = vmatprep.subr.mxu0 0.0
    %1166 = vmatpush2.msra.mxu0 0.0
    %1167 = vmatprep.subr.mxu0 0.0
    %1168 = vmatpush2.msra.mxu0 0.0
    %1169 = vmatprep.subr.mxu0 0.0
    %1170 = vmatpush2.msra.mxu0 0.0
    %1171 = vmatprep.subr.mxu0 0.0
    %1172 = vmatpush2.msra.mxu0 0.0
    %1173 = vmatprep.subr.mxu0 0.0
    %1174 = vmatpush2.msra.mxu0 0.0
    %1175 = vmatprep.subr.mxu0 0.0
    %1176 = vmatpush2.msra.mxu0 0.0
    %1177 = vmatprep.subr.mxu0 0.0
    %1178 = vmatpush2.msra.mxu0 0.0
    %1179 = vmatprep.subr.mxu0 0.0
    %1180 = vmatpush2.msra.mxu0 0.0
    %1181 = vmatprep.subr.mxu0 0.0
    %1182 = vmatpush2.msra.mxu0 0.0
    %1183 = vmatprep.subr.mxu0 0.0
    %1184 = vmatpush2.msra.mxu0 0.0
    %1185 = vmatprep.subr.mxu0 0.0
    %1186 = vmatpush2.msra.mxu0 0.0
    %1187 = vmatprep.subr.mxu0 0.0
    %1188 = vmatpush2.msra.mxu0 0.0
    %1189 = vmatprep.subr.mxu0 0.0
    %1190 = vmatpush2.msra.mxu0 0.0
    %1191 = vmatprep.subr.mxu0 0.0
    %1192 = vmatpush2.msra.mxu0 0.0
    %1193 = vmatprep.subr.mxu0 0.0
    %1194 = vmatpush2.msra.mxu0 0.0
    %1195 = vmatprep.mubr.f32.mxu0 0.0
    %1196 = vmatmul.mubr.f32.gmra.mxu0 %v1109
    %v1197 = vpop.f32.mrf.mxu0
    %v1198 = vadd.f32 %v1130, %v1197
    %v1199 = vpop.f32.mrf.mxu0
    %1200 = vdwg.mxu0
    %v1201 = vmax.f32 %v1198, 0.0
    %v1202 = vld [vmem:[#allocation7 + $0xe0] sm:$0xff]
    %v1203 = vld [vmem:[#allocation7 + $0xe8] sm:$0xff]
    %v1204 = vld [vmem:[#allocation7 + $0xf0] sm:$0xff]
    %v1205 = vld [vmem:[#allocation7 + $0xf8] sm:$0xff]
    %v1206 = vld [vmem:[#allocation7 + $0x100] sm:$0xff]
    %v1207 = vld [vmem:[#allocation7 + $0x108] sm:$0xff]
    %v1208 = vld [vmem:[#allocation7 + $0x110] sm:$0xff]
    %v1209 = vld [vmem:[#allocation7 + $0x118] sm:$0xff]
    %v1210 = vld [vmem:[#allocation7 + $0x120] sm:$0xff]
    %v1211 = vld [vmem:[#allocation7 + $0x128] sm:$0xff]
    %v1212 = vld [vmem:[#allocation7 + $0x130] sm:$0xff]
    %v1213 = vld [vmem:[#allocation7 + $0x138] sm:$0xff]
    %v1214 = vld [vmem:[#allocation7 + $0x140] sm:$0xff]
    %v1215 = vld [vmem:[#allocation7 + $0x148] sm:$0xff]
    %v1216 = vld [vmem:[#allocation7 + $0x150] sm:$0xff]
    %v1217 = vld [vmem:[#allocation7 + $0x158] sm:$0xff]
    %v1218 = vld [vmem:[#allocation7 + $0x160] sm:$0xff]
    %v1219 = vld [vmem:[#allocation7 + $0x168] sm:$0xff]
    %v1220 = vld [vmem:[#allocation7 + $0x170] sm:$0xff]
    %v1221 = vld [vmem:[#allocation7 + $0x178] sm:$0xff]
    %v1222 = vld [vmem:[#allocation7 + $0x180] sm:$0xff]
    %v1223 = vld [vmem:[#allocation7 + $0x188] sm:$0xff]
    %v1224 = vld [vmem:[#allocation7 + $0x190] sm:$0xff]
    %v1225 = vld [vmem:[#allocation7 + $0x198] sm:$0xff]
    %v1226 = vld [vmem:[#allocation7 + $0x1a0] sm:$0xff]
    %v1227 = vld [vmem:[#allocation7 + $0x1a8] sm:$0xff]
    %v1228 = vld [vmem:[#allocation7 + $0x1b0] sm:$0xff]
    %v1229 = vld [vmem:[#allocation7 + $0x1b8] sm:$0xff]
    %v1230 = vld [vmem:[#allocation7 + $0x1c0] sm:$0xff]
    %v1231 = vld [vmem:[#allocation7 + $0x1c8] sm:$0xff]
    %v1232 = vld [vmem:[#allocation7 + $0x1d0] sm:$0xff]
    %v1233 = vld [vmem:[#allocation7 + $0x1d8] sm:$0xff]
    %1234 = vmatprep.subr.mxu0 0.0
    %1235 = vmatpush1.msra.mxu0 %v1233
    %1236 = vmatprep.subr.mxu0 0.0
    %1237 = vmatpush1.msra.mxu0 %v1232
    %1238 = vmatprep.subr.mxu0 0.0
    %1239 = vmatpush1.msra.mxu0 %v1231
    %1240 = vmatprep.subr.mxu0 0.0
    %1241 = vmatpush1.msra.mxu0 %v1230
    %1242 = vmatprep.subr.mxu0 0.0
    %1243 = vmatpush1.msra.mxu0 %v1229
    %1244 = vmatprep.subr.mxu0 0.0
    %1245 = vmatpush1.msra.mxu0 %v1228
    %1246 = vmatprep.subr.mxu0 0.0
    %1247 = vmatpush1.msra.mxu0 %v1227
    %1248 = vmatprep.subr.mxu0 0.0
    %1249 = vmatpush1.msra.mxu0 %v1226
    %1250 = vmatprep.subr.mxu0 0.0
    %1251 = vmatpush1.msra.mxu0 %v1225
    %1252 = vmatprep.subr.mxu0 0.0
    %1253 = vmatpush1.msra.mxu0 %v1224
    %1254 = vmatprep.subr.mxu0 0.0
    %1255 = vmatpush1.msra.mxu0 %v1223
    %1256 = vmatprep.subr.mxu0 0.0
    %1257 = vmatpush1.msra.mxu0 %v1222
    %1258 = vmatprep.subr.mxu0 0.0
    %1259 = vmatpush1.msra.mxu0 %v1221
    %1260 = vmatprep.subr.mxu0 0.0
    %1261 = vmatpush1.msra.mxu0 %v1220
    %1262 = vmatprep.subr.mxu0 0.0
    %1263 = vmatpush1.msra.mxu0 %v1219
    %1264 = vmatprep.subr.mxu0 0.0
    %1265 = vmatpush1.msra.mxu0 %v1218
    %1266 = vmatprep.subr.mxu0 0.0
    %1267 = vmatpush2.msra.mxu0 0.0
    %1268 = vmatprep.subr.mxu0 0.0
    %1269 = vmatpush2.msra.mxu0 0.0
    %1270 = vmatprep.subr.mxu0 0.0
    %1271 = vmatpush2.msra.mxu0 0.0
    %1272 = vmatprep.subr.mxu0 0.0
    %1273 = vmatpush2.msra.mxu0 0.0
    %1274 = vmatprep.subr.mxu0 0.0
    %1275 = vmatpush2.msra.mxu0 0.0
    %1276 = vmatprep.subr.mxu0 0.0
    %1277 = vmatpush2.msra.mxu0 0.0
    %1278 = vmatprep.subr.mxu0 0.0
    %1279 = vmatpush2.msra.mxu0 0.0
    %1280 = vmatprep.subr.mxu0 0.0
    %1281 = vmatpush2.msra.mxu0 0.0
    %1282 = vmatprep.subr.mxu0 0.0
    %1283 = vmatpush2.msra.mxu0 0.0
    %1284 = vmatprep.subr.mxu0 0.0
    %1285 = vmatpush2.msra.mxu0 0.0
    %1286 = vmatprep.subr.mxu0 0.0
    %1287 = vmatpush2.msra.mxu0 0.0
    %1288 = vmatprep.subr.mxu0 0.0
    %1289 = vmatpush2.msra.mxu0 0.0
    %1290 = vmatprep.subr.mxu0 0.0
    %1291 = vmatpush2.msra.mxu0 0.0
    %1292 = vmatprep.subr.mxu0 0.0
    %1293 = vmatpush2.msra.mxu0 0.0
    %1294 = vmatprep.subr.mxu0 0.0
    %1295 = vmatpush2.msra.mxu0 0.0
    %1296 = vmatprep.subr.mxu0 0.0
    %1297 = vmatpush2.msra.mxu0 0.0
    %1298 = vmatprep.mubr.f32.mxu0 0.0
    %1299 = vmatmul.mubr.f32.gmra.mxu0 %v1024
    %v1300 = vpop.f32.mrf.mxu0
    %v1301 = vadd.f32 0.0, %v1300
    %v1302 = vpop.f32.mrf.mxu0
    %1303 = vdwg.mxu0
    %1304 = vmatprep.subr.mxu0 0.0
    %1305 = vmatpush1.msra.mxu0 %v1217
    %1306 = vmatprep.subr.mxu0 0.0
    %1307 = vmatpush1.msra.mxu0 %v1216
    %1308 = vmatprep.subr.mxu0 0.0
    %1309 = vmatpush1.msra.mxu0 %v1215
    %1310 = vmatprep.subr.mxu0 0.0
    %1311 = vmatpush1.msra.mxu0 %v1214
    %1312 = vmatprep.subr.mxu0 0.0
    %1313 = vmatpush1.msra.mxu0 %v1213
    %1314 = vmatprep.subr.mxu0 0.0
    %1315 = vmatpush1.msra.mxu0 %v1212
    %1316 = vmatprep.subr.mxu0 0.0
    %1317 = vmatpush1.msra.mxu0 %v1211
    %1318 = vmatprep.subr.mxu0 0.0
    %1319 = vmatpush1.msra.mxu0 %v1210
    %1320 = vmatprep.subr.mxu0 0.0
    %1321 = vmatpush1.msra.mxu0 %v1209
    %1322 = vmatprep.subr.mxu0 0.0
    %1323 = vmatpush1.msra.mxu0 %v1208
    %1324 = vmatprep.subr.mxu0 0.0
    %1325 = vmatpush1.msra.mxu0 %v1207
    %1326 = vmatprep.subr.mxu0 0.0
    %1327 = vmatpush1.msra.mxu0 %v1206
    %1328 = vmatprep.subr.mxu0 0.0
    %1329 = vmatpush1.msra.mxu0 %v1205
    %1330 = vmatprep.subr.mxu0 0.0
    %1331 = vmatpush1.msra.mxu0 %v1204
    %1332 = vmatprep.subr.mxu0 0.0
    %1333 = vmatpush1.msra.mxu0 %v1203
    %1334 = vmatprep.subr.mxu0 0.0
    %1335 = vmatpush1.msra.mxu0 %v1202
    %1336 = vmatprep.subr.mxu0 0.0
    %1337 = vmatpush2.msra.mxu0 0.0
    %1338 = vmatprep.subr.mxu0 0.0
    %1339 = vmatpush2.msra.mxu0 0.0
    %1340 = vmatprep.subr.mxu0 0.0
    %1341 = vmatpush2.msra.mxu0 0.0
    %1342 = vmatprep.subr.mxu0 0.0
    %1343 = vmatpush2.msra.mxu0 0.0
    %1344 = vmatprep.subr.mxu0 0.0
    %1345 = vmatpush2.msra.mxu0 0.0
    %1346 = vmatprep.subr.mxu0 0.0
    %1347 = vmatpush2.msra.mxu0 0.0
    %1348 = vmatprep.subr.mxu0 0.0
    %1349 = vmatpush2.msra.mxu0 0.0
    %1350 = vmatprep.subr.mxu0 0.0
    %1351 = vmatpush2.msra.mxu0 0.0
    %1352 = vmatprep.subr.mxu0 0.0
    %1353 = vmatpush2.msra.mxu0 0.0
    %1354 = vmatprep.subr.mxu0 0.0
    %1355 = vmatpush2.msra.mxu0 0.0
    %1356 = vmatprep.subr.mxu0 0.0
    %1357 = vmatpush2.msra.mxu0 0.0
    %1358 = vmatprep.subr.mxu0 0.0
    %1359 = vmatpush2.msra.mxu0 0.0
    %1360 = vmatprep.subr.mxu0 0.0
    %1361 = vmatpush2.msra.mxu0 0.0
    %1362 = vmatprep.subr.mxu0 0.0
    %1363 = vmatpush2.msra.mxu0 0.0
    %1364 = vmatprep.subr.mxu0 0.0
    %1365 = vmatpush2.msra.mxu0 0.0
    %1366 = vmatprep.subr.mxu0 0.0
    %1367 = vmatpush2.msra.mxu0 0.0
    %1368 = vmatprep.mubr.f32.mxu0 0.0
    %1369 = vmatmul.mubr.f32.gmra.mxu0 %v1201
    %v1370 = vpop.f32.mrf.mxu0
    %v1371 = vadd.f32 %v1301, %v1370
    %v1372 = vpop.f32.mrf.mxu0
    %1373 = vdwg.mxu0
    %v1374 = vld [vmem:[#allocation7 + $0x1e0] sm:$0x1]
    %v1375 = vlaneseq
    %v1376 = vshrl.u32 %v1375, 7
    %v1377 = vsub.s32 0, %v1376
    %v1378 = vrot.slane %v1374, %v1377
    %v1379 = vadd.f32 %v1371, %v1378
    %v1380 = vmax.f32 %v1379, 0.0
    %v1381 = vld [vmem:[#allocation7 + $0x1e8] sm:$0x1]
    %v1382 = vlaneseq
    %v1383 = vshrl.u32 %v1382, 7
    %v1384 = vsub.s32 0, %v1383
    %v1385 = vrot.slane %v1381, %v1384
    %v1386 = vmul.f32 %v1380, %v1385
    %1387 = vadd.xlane.f32.xlu0 %v1386
    %v1388 = vpop.xlane.xlu0 %1387
    %v1389 = vld [vmem:[#allocation7 + $0x1f0] sm:$0x1]
    %v1390 = vlaneseq
    %v1391 = vshrl.u32 %v1390, 7
    %v1392 = vsub.s32 0, %v1391
    %v1393 = vrot.slane %v1389, %v1392
    %v1394 = vmul.f32 %v1024, %v1393
    %1395 = vadd.xlane.f32.xlu0 %v1394
    %v1396 = vpop.xlane.xlu0 %1395
    %v1397 = vadd.f32 %v1388, %v1396
    %vm1398 = vcmask 7168
    %1399 = vst.msk [vmem:[%s3] sm:$0xff] %vm1398, %v1397
    // Predicated region
    $region26: #{tpu_custom_call.1} parent=1 // pred_check
      _
    $region27: #{tpu_custom_call.1} parent=1 // pred_check_branch
      %1401 = sbr.rel (0) target = $region29
    $region28: #{tpu_custom_call.1} parent=1 // pred_region
      _
    $region29: #{tpu_custom_call.1} parent=1 // pred_fallthru
      _
    // Predicated region
    $region30: #{tpu_custom_call.1} parent=1 // pred_check
      _
    $region31: #{tpu_custom_call.1} parent=1 // pred_check_branch
      %1403 = sbr.rel (0) target = $region33
    $region32: #{tpu_custom_call.1} parent=1 // pred_region
      _
    $region33: #{tpu_custom_call.1} parent=1 // pred_fallthru
      _
    %1404 = vsyncpa [#allocation4], 1
    %1405 = vsyncpa [#allocation6], 1

</llo_original>
